<compile_context>
chip_gen: v5e
topology: v5e:2x2
jax: 0.10.0
libtpu: 0.0.40
codegen_flags: <defaults>
</compile_context>

<pallas_src>
import functools

import jax
import jax.numpy as jnp
from jax.experimental import pallas as pl
from jax.experimental.pallas import tpu as pltpu


def _round_up(x, m):
    return ((x + m - 1) // m) * m


def _pick_tile_blocks(total_blocks, want_blocks, min_tiles):
    """Largest divisor d of total_blocks with d <= want_blocks and
    total_blocks // d >= min_tiles; falls back to the largest divisor <= want."""
    best = None
    for d in range(1, total_blocks + 1):
        if total_blocks % d == 0 and d <= want_blocks and total_blocks // d >= min_tiles:
            best = d
    if best is None:
        for d in range(1, total_blocks + 1):
            if total_blocks % d == 0 and d <= want_blocks:
                best = d
    return best or 1


def _rgcn_agg_kernel(a_ref, xw_ref, dsc_ref, bsum_ref, o_ref, acc_ref, *, apply_relu):
    """One grid step = (dst tile i, relation r, src tile k).

    Computes  o[i] = relu?( b_sum + sum_r dsc_r[i] * ( sum_k A_r[i,k] @ XW_r[k] ) )
    where XW_r = (D_src_r^{-1/2} X) W_r was hoisted out of the grid.
    The raw 0/1 int8 adjacency tile feeds the MXU after a single cheap upcast;
    there is no per-element normalization in the inner loop.
    """
    r = pl.program_id(1)
    k = pl.program_id(2)
    n_r = pl.num_programs(1)
    n_k = pl.num_programs(2)

    # Bias folded into the accumulator init: output block starts at sum_r b_r.
    @pl.when(jnp.logical_and(r == 0, k == 0))
    def _():
        o_ref[...] = jnp.broadcast_to(bsum_ref[...], o_ref.shape)

    # Per-(i, r) k-accumulator: keeps the (tm, Fp_out) output RMW to once per relation.
    @pl.when(k == 0)
    def _():
        acc_ref[...] = jnp.zeros_like(acc_ref)

    # int8 {0,1} -> bf16 (via f32: two plain VPU passes, far cheaper than the old
    # upcast + 2 muls + downcast normalization), then straight into the MXU.
    a = a_ref[...].astype(jnp.float32).astype(jnp.bfloat16)
    acc_ref[...] += jnp.dot(a, xw_ref[...], preferred_element_type=jnp.float32)

    # D_dst^{-1/2} row-scale applied once per (i, r), fused into the output add.
    @pl.when(k == n_k - 1)
    def _():
        o_ref[...] += dsc_ref[...] * acc_ref[...]

    if apply_relu:
        @pl.when(jnp.logical_and(r == n_r - 1, k == n_k - 1))
        def _():
            o_ref[...] = jnp.maximum(o_ref[...], 0.0)


def hetero_graph_conv(adj_p, dsc, ssc, x, w, b, *, relu, tm, tk):
    """One HeteroGraphConv('sum') layer.

    adj_p: (R, Np, Np) int8 raw 0/1 adjacency (dst x src), zero-padded.
    dsc:   (R, Np, 1) f32 inv-sqrt dst (in-)degrees, padded.
    ssc:   (R, N)     f32 inv-sqrt src (out-)degrees (unpadded; used in the hoist).
    x:     (N, F_in) f32;  w: (R, F_in, F_out);  b: (R, 1, F_out).
    Returns (N, F_out) f32.
    """
    R, Np, _ = adj_p.shape
    N, F_in = x.shape
    F_out = w.shape[2]
    Fp_out = _round_up(F_out, 128)

    # Hoisted projection with fused src normalization (once per layer, XLA einsum):
    #   XW_r = (D_src_r^{-1/2} * X) @ W_r  -> (R, Np, Fp_out) bf16, lane-dense.
    xw = jnp.einsum("rnf,rfo->rno", ssc[:, :, None] * x[None, :, :], w)
    xw = jnp.pad(xw, ((0, 0), (0, Np - N), (0, Fp_out - F_out))).astype(jnp.bfloat16)

    # Bias folded into the accumulator init: sum_r b_r (HeteroGraphConv 'sum').
    bsum = jnp.pad(jnp.sum(b[:, 0, :], axis=0)[None, :],
                   ((0, 0), (0, Fp_out - F_out))).astype(jnp.float32)

    ni, nk = Np // tm, Np // tk

    # VMEM footprint: double-buffered input streams + resident output + scratch.
    vmem_needed = (2 * tm * tk * 1            # adjacency tiles (int8)
                   + 2 * tk * Fp_out * 2      # XW tiles (bf16)
                   + 2 * tm * 128 * 4         # dsc block (lane-padded (tm,1))
                   + 2 * 8 * Fp_out * 4       # bias row
                   + 2 * tm * Fp_out * 4      # resident output block
                   + tm * Fp_out * 4)         # f32 k-accumulator scratch
    try:
        phys_vmem = int(pltpu.get_tpu_info().vmem_capacity_bytes)
    except Exception:
        phys_vmem = 64 * 2**20                # conservative (v7x per-TC)
    vmem_limit = int(min(int(0.75 * phys_vmem), max(32 * 2**20, 2 * vmem_needed)))

    flops = 2 * R * Np * Np * Fp_out                        # in-kernel matmuls only
    bytes_accessed = (R * Np * Np * 1                       # adjacency (int8), once
                      + ni * R * Np * Fp_out * 2            # XW re-streamed per dst tile
                      + R * Np * 4 + Np * Fp_out * 4)       # dsc + output

    kernel = functools.partial(_rgcn_agg_kernel, apply_relu=relu)

    out_p = pl.pallas_call(
        kernel,
        out_shape=jax.ShapeDtypeStruct((Np, Fp_out), jnp.float32),
        grid_spec=pltpu.PrefetchScalarGridSpec(
            num_scalar_prefetch=0,
            grid=(ni, R, nk),
            in_specs=[
                pl.BlockSpec((None, tm, tk), lambda i, r, k: (r, i, k)),      # A_r tile
                pl.BlockSpec((None, tk, Fp_out), lambda i, r, k: (r, k, 0)),  # XW_r tile
                pl.BlockSpec((None, tm, 1), lambda i, r, k: (r, i, 0)),       # 1/sqrt(deg_dst)
                pl.BlockSpec((1, Fp_out), lambda i, r, k: (0, 0)),            # sum_r b_r
            ],
            out_specs=pl.BlockSpec((tm, Fp_out), lambda i, r, k: (i, 0)),
            scratch_shapes=[pltpu.VMEM((tm, Fp_out), jnp.float32)],
        ),
        compiler_params=pltpu.CompilerParams(
            dimension_semantics=("parallel", "arbitrary", "arbitrary"),
            vmem_limit_bytes=vmem_limit,
        ),
        cost_estimate=pl.CostEstimate(flops=int(flops), transcendentals=0,
                                      bytes_accessed=int(bytes_accessed)),
    )(adj_p, xw, dsc, bsum)

    return out_p[:N, :F_out]


def rgcn_forward(adj, x, params, *, tile_m=1024, tile_k=1024):
    """Two-layer RGCN forward. adj: (R, N, N) raw 0/1 dense adjacency (dst x src),
    one slice per relation; x: (N, in_feats). Returns (N, out_feats) f32."""
    R, N, _ = adj.shape

    # Keep node padding small (adjacency bytes dominate HBM traffic).
    gran = 128 if N <= 1024 else 512
    Np = _round_up(N, gran)
    q = Np // 128

    # Tiles are divisors of Np (no lcm blow-up). tm additionally targets >= 2 dst
    # blocks so the 'parallel' axis can shard across both TensorCores on v7x.
    tm = 128 * _pick_tile_blocks(q, max(1, tile_m // 128), min_tiles=2)
    tk = 128 * _pick_tile_blocks(q, max(1, tile_k // 128), min_tiles=1)

    # DGL GraphConv norm='both': D_dst^{-1/2} A D_src^{-1/2}, degrees clamped >= 1.
    deg_dst = jnp.maximum(jnp.sum(adj, axis=2), 1.0)   # (R, N) in-degree of dst
    deg_src = jnp.maximum(jnp.sum(adj, axis=1), 1.0)   # (R, N) out-degree of src
    dsc = jnp.pad(jax.lax.rsqrt(deg_dst), ((0, 0), (0, Np - N)),
                  constant_values=1.0).reshape(R, Np, 1)
    ssc = jax.lax.rsqrt(deg_src)                       # folded into the XW hoist

    # Raw 0/1 adjacency stored as int8 in HBM (halves the dominant stream vs bf16);
    # the normalized f32 adjacency is never materialized anywhere.
    adj_p = jnp.pad(adj, ((0, 0), (0, Np - N), (0, Np - N))).astype(jnp.int8)

    h = hetero_graph_conv(adj_p, dsc, ssc, x, params["w1"], params["b1"],
                          relu=True, tm=tm, tk=tk)
    out = hetero_graph_conv(adj_p, dsc, ssc, h, params["w2"], params["b2"],
                            relu=False, tm=tm, tk=tk)
    return out


def init_rgcn_params(key, in_feats, hid_feats, out_feats, num_rels):
    """Glorot-style init for W (matching GraphConv's xavier_uniform). Biases get
    small random values (DGL default is zeros) so the bias path is exercised."""
    k1, k2, k3, k4 = jax.random.split(key, 4)

    def glorot(k, fan_in, fan_out, shape):
        limit = jnp.sqrt(6.0 / (fan_in + fan_out))
        return jax.random.uniform(k, shape, jnp.float32, -limit, limit)

    w1 = glorot(k1, in_feats, hid_feats, (num_rels, in_feats, hid_feats))
    b1 = 0.1 * jax.random.normal(k3, (num_rels, 1, hid_feats), jnp.float32)
    w2 = glorot(k2, hid_feats, out_feats, (num_rels, hid_feats, out_feats))
    b2 = 0.1 * jax.random.normal(k4, (num_rels, 1, out_feats), jnp.float32)
    return {"w1": w1, "b1": b1, "w2": w2, "b2": b2}


def _reference_forward(adj, x, params):
    """Pure-JAX f32 reference of the same RGCN forward."""
    deg_dst = jnp.maximum(jnp.sum(adj, axis=2), 1.0)
    deg_src = jnp.maximum(jnp.sum(adj, axis=1), 1.0)
    adj_n = (adj * jax.lax.rsqrt(deg_dst)[:, :, None]
                 * jax.lax.rsqrt(deg_src)[:, None, :])
    h = jnp.einsum("rij,jf->rif", adj_n, x)
    h = jnp.einsum("rif,rfo->io", h, params["w1"]) + params["b1"][:, 0, :].sum(0)
    h = jnp.maximum(h, 0.0)
    o = jnp.einsum("rij,jf->rif", adj_n, h)
    o = jnp.einsum("rif,rfo->io", o, params["w2"]) + params["b2"][:, 0, :].sum(0)
    return o


if __name__ == "__main__":
    key = jax.random.PRNGKey(0)
    k_adj, k_x, k_p = jax.random.split(key, 3)

    N = 256          # nodes
    R = 3            # relation types (rel_names)
    IN, HID, OUT = 16, 32, 8

    # Random sparse-ish dense adjacency per relation (dst x src), 0/1 float.
    adj = jax.random.bernoulli(k_adj, p=0.08, shape=(R, N, N)).astype(jnp.float32)
    x = jax.random.normal(k_x, (N, IN), jnp.float32)
    params = init_rgcn_params(k_p, IN, HID, OUT, R)

    # Small tiles so the (dst tile, relation, src tile) grid is fully exercised:
    # grid = (2, 3, 2).  Defaults (1024) are intended for large graphs.
    fwd = jax.jit(functools.partial(rgcn_forward, tile_m=128, tile_k=128))
    out = jax.block_until_ready(fwd(adj, x, params))

    ref = _reference_forward(adj, x, params)
    assert out.shape == (N, OUT)
    err = float(jnp.max(jnp.abs(out - ref)))
    scale = float(jnp.max(jnp.abs(ref))) + 1e-6
    # bf16 projected features (f32 accumulation; adjacency & degree scales exact
    # in f32) -> modest tolerance vs the pure-f32 reference.
    assert err <= 5e-2 * scale, f"mismatch vs reference: max err {err}, scale {scale}"

    print("KERNEL_OK")
</pallas_src>

<mosaic_0001>
module attributes {stable_mosaic.version = 11 : i64} {
  func.func @_rgcn_agg_kernel(%arg0: i32, %arg1: i32, %arg2: i32, %arg3: memref<1x128x128xi8, #tpu.memory_space<vmem>>, %arg4: memref<1x128x128xbf16, #tpu.memory_space<vmem>>, %arg5: memref<1x128x1xf32, #tpu.memory_space<vmem>>, %arg6: memref<1x128xf32, #tpu.memory_space<vmem>>, %arg7: memref<128x128xf32, #tpu.memory_space<vmem>>, %arg8: memref<128x128xf32, #tpu.memory_space<vmem>>) attributes {dimension_semantics = [#tpu.dimension_semantics<parallel>, #tpu.dimension_semantics<arbitrary>, #tpu.dimension_semantics<arbitrary>], iteration_bounds = array<i64: 2, 3, 2>, scalar_prefetch = 0 : i64, scratch_operands = 1 : i64, tpu.core_type = #tpu.core_type<tc>, window_params = [{transform_indices = @transform_0, window_bounds = array<i64: 1, 128, 128>}, {transform_indices = @transform_1, window_bounds = array<i64: 1, 128, 128>}, {transform_indices = @transform_2, window_bounds = array<i64: 1, 128, 1>}, {pipeline_mode = #tpu.pipeline_mode<synchronous>, transform_indices = @transform_3, window_bounds = array<i64: 1, 128>}, {transform_indices = @transform_4, window_bounds = array<i64: 128, 128>}]} {
    %c0_i32 = arith.constant 0 : i32
    %0 = arith.cmpi eq, %arg1, %c0_i32 : i32
    %c0_i32_0 = arith.constant 0 : i32
    %1 = arith.cmpi eq, %arg2, %c0_i32_0 : i32
    %2 = arith.andi %0, %1 : i1
    %3 = arith.extui %2 : i1 to i32
    %c0_i32_1 = arith.constant 0 : i32
    %4 = arith.cmpi ne, %3, %c0_i32_1 : i32
    scf.if %4 {
      %c0_16 = arith.constant 0 : index
      %c0_17 = arith.constant 0 : index
      %26 = vector.load %arg6[%c0_16, %c0_17] : memref<1x128xf32, #tpu.memory_space<vmem>>, vector<1x128xf32>
      %27 = vector.shape_cast %26 : vector<1x128xf32> to vector<1x128xf32>
      %28 = vector.broadcast %27 : vector<1x128xf32> to vector<128x128xf32>
      %c0_18 = arith.constant 0 : index
      %c0_19 = arith.constant 0 : index
      %29 = vector.load %arg7[%c0_18, %c0_19] : memref<128x128xf32, #tpu.memory_space<vmem>>, vector<128x128xf32>
      tpu.vector_store %arg7[%c0_18, %c0_19], %28 {strides = array<i32>} : memref<128x128xf32, #tpu.memory_space<vmem>>, vector<128x128xf32>,
    } else {
    }
    %c0_i32_2 = arith.constant 0 : i32
    %5 = arith.cmpi eq, %arg2, %c0_i32_2 : i32
    %6 = arith.extui %5 : i1 to i32
    %c0_i32_3 = arith.constant 0 : i32
    %7 = arith.cmpi ne, %6, %c0_i32_3 : i32
    scf.if %7 {
      %cst_16 = arith.constant 0.000000e+00 : f32
      %26 = vector.broadcast %cst_16 : f32 to vector<128x128xf32>
      %c0_17 = arith.constant 0 : index
      %c0_18 = arith.constant 0 : index
      %27 = vector.load %arg8[%c0_17, %c0_18] : memref<128x128xf32, #tpu.memory_space<vmem>>, vector<128x128xf32>
      tpu.vector_store %arg8[%c0_17, %c0_18], %26 {strides = array<i32>} : memref<128x128xf32, #tpu.memory_space<vmem>>, vector<128x128xf32>,
    } else {
    }
    %c0 = arith.constant 0 : index
    %c0_4 = arith.constant 0 : index
    %c0_5 = arith.constant 0 : index
    %8 = vector.load %arg3[%c0, %c0_4, %c0_5] : memref<1x128x128xi8, #tpu.memory_space<vmem>>, vector<1x128x128xi8>
    %9 = vector.shape_cast %8 : vector<1x128x128xi8> to vector<128x128xi8>
    %10 = arith.sitofp %9 : vector<128x128xi8> to vector<128x128xf32>
    %11 = arith.truncf %10 : vector<128x128xf32> to vector<128x128xbf16>
    %c0_6 = arith.constant 0 : index
    %c0_7 = arith.constant 0 : index
    %12 = vector.load %arg8[%c0_6, %c0_7] : memref<128x128xf32, #tpu.memory_space<vmem>>, vector<128x128xf32>
    %c0_8 = arith.constant 0 : index
    %c0_9 = arith.constant 0 : index
    %c0_10 = arith.constant 0 : index
    %13 = vector.load %arg4[%c0_8, %c0_9, %c0_10] : memref<1x128x128xbf16, #tpu.memory_space<vmem>>, vector<1x128x128xbf16>
    %14 = vector.shape_cast %13 : vector<1x128x128xbf16> to vector<128x128xbf16>
    %cst = arith.constant dense<0.000000e+00> : vector<128x128xf32>
    %15 = tpu.matmul %11, %14, %cst {dimension_numbers = #tpu.dot_dimension_numbers<[1], [0], [0], [1], [0, 0, 1, 1], [], []>} : vector<128x128xbf16>, vector<128x128xbf16>, vector<128x128xf32> -> vector<128x128xf32>
    %16 = arith.addf %12, %15 : vector<128x128xf32>
    %c0_11 = arith.constant 0 : index
    %c0_12 = arith.constant 0 : index
    %17 = vector.load %arg8[%c0_11, %c0_12] : memref<128x128xf32, #tpu.memory_space<vmem>>, vector<128x128xf32>
    tpu.vector_store %arg8[%c0_11, %c0_12], %16 {strides = array<i32>} : memref<128x128xf32, #tpu.memory_space<vmem>>, vector<128x128xf32>,
    %c1_i32 = arith.constant 1 : i32
    %18 = arith.cmpi eq, %arg2, %c1_i32 : i32
    %19 = arith.extui %18 : i1 to i32
    %c0_i32_13 = arith.constant 0 : i32
    %20 = arith.cmpi ne, %19, %c0_i32_13 : i32
    scf.if %20 {
      %c0_16 = arith.constant 0 : index
      %c0_17 = arith.constant 0 : index
      %26 = vector.load %arg7[%c0_16, %c0_17] : memref<128x128xf32, #tpu.memory_space<vmem>>, vector<128x128xf32>
      %c0_18 = arith.constant 0 : index
      %c0_19 = arith.constant 0 : index
      %c0_20 = arith.constant 0 : index
      %27 = vector.load %arg5[%c0_18, %c0_19, %c0_20] : memref<1x128x1xf32, #tpu.memory_space<vmem>>, vector<1x128x1xf32>
      %28 = vector.shape_cast %27 : vector<1x128x1xf32> to vector<128x1xf32>
      %c0_21 = arith.constant 0 : index
      %c0_22 = arith.constant 0 : index
      %29 = vector.load %arg8[%c0_21, %c0_22] : memref<128x128xf32, #tpu.memory_space<vmem>>, vector<128x128xf32>
      %30 = vector.broadcast %28 : vector<128x1xf32> to vector<128x128xf32>
      %31 = arith.mulf %30, %29 : vector<128x128xf32>
      %32 = arith.addf %26, %31 : vector<128x128xf32>
      %c0_23 = arith.constant 0 : index
      %c0_24 = arith.constant 0 : index
      %33 = vector.load %arg7[%c0_23, %c0_24] : memref<128x128xf32, #tpu.memory_space<vmem>>, vector<128x128xf32>
      tpu.vector_store %arg7[%c0_23, %c0_24], %32 {strides = array<i32>} : memref<128x128xf32, #tpu.memory_space<vmem>>, vector<128x128xf32>,
    } else {
    }
    %c2_i32 = arith.constant 2 : i32
    %21 = arith.cmpi eq, %arg1, %c2_i32 : i32
    %c1_i32_14 = arith.constant 1 : i32
    %22 = arith.cmpi eq, %arg2, %c1_i32_14 : i32
    %23 = arith.andi %21, %22 : i1
    %24 = arith.extui %23 : i1 to i32
    %c0_i32_15 = arith.constant 0 : i32
    %25 = arith.cmpi ne, %24, %c0_i32_15 : i32
    scf.if %25 {
      %c0_16 = arith.constant 0 : index
      %c0_17 = arith.constant 0 : index
      %26 = vector.load %arg7[%c0_16, %c0_17] : memref<128x128xf32, #tpu.memory_space<vmem>>, vector<128x128xf32>
      %cst_18 = arith.constant 0.000000e+00 : f32
      %27 = vector.broadcast %cst_18 : f32 to vector<128x128xf32>
      %28 = arith.maximumf %26, %27 : vector<128x128xf32>
      %c0_19 = arith.constant 0 : index
      %c0_20 = arith.constant 0 : index
      %29 = vector.load %arg7[%c0_19, %c0_20] : memref<128x128xf32, #tpu.memory_space<vmem>>, vector<128x128xf32>
      tpu.vector_store %arg7[%c0_19, %c0_20], %28 {strides = array<i32>} : memref<128x128xf32, #tpu.memory_space<vmem>>, vector<128x128xf32>,
    } else {
    }
    return
  }
  func.func @transform_0(%arg0: i32, %arg1: i32, %arg2: i32) -> (i32, i32, i32) {
    %c0_i32 = arith.constant 0 : i32
    return %arg1, %arg0, %arg2 : i32, i32, i32
  }
  func.func @transform_1(%arg0: i32, %arg1: i32, %arg2: i32) -> (i32, i32, i32) {
    %c0_i32 = arith.constant 0 : i32
    %c0_i32_0 = arith.constant 0 : i32
    return %arg1, %arg2, %c0_i32 : i32, i32, i32
  }
  func.func @transform_2(%arg0: i32, %arg1: i32, %arg2: i32) -> (i32, i32, i32) {
    %c0_i32 = arith.constant 0 : i32
    %c0_i32_0 = arith.constant 0 : i32
    return %arg1, %arg0, %c0_i32 : i32, i32, i32
  }
  func.func @transform_3(%arg0: i32, %arg1: i32, %arg2: i32) -> (i32, i32) {
    %c0_i32 = arith.constant 0 : i32
    %c0_i32_0 = arith.constant 0 : i32
    %c0_i32_1 = arith.constant 0 : i32
    return %c0_i32, %c0_i32_0 : i32, i32
  }
  func.func @transform_4(%arg0: i32, %arg1: i32, %arg2: i32) -> (i32, i32) {
    %c0_i32 = arith.constant 0 : i32
    %c0_i32_0 = arith.constant 0 : i32
    return %arg0, %c0_i32 : i32, i32
  }
}

module attributes {stable_mosaic.version = 11 : i64} {
  func.func @_rgcn_agg_kernel(%arg0: i32, %arg1: i32, %arg2: i32, %arg3: memref<1x128x128xi8, #tpu.memory_space<vmem>>, %arg4: memref<1x128x128xbf16, #tpu.memory_space<vmem>>, %arg5: memref<1x128x1xf32, #tpu.memory_space<vmem>>, %arg6: memref<1x128xf32, #tpu.memory_space<vmem>>, %arg7: memref<128x128xf32, #tpu.memory_space<vmem>>, %arg8: memref<128x128xf32, #tpu.memory_space<vmem>>) attributes {dimension_semantics = [#tpu.dimension_semantics<parallel>, #tpu.dimension_semantics<arbitrary>, #tpu.dimension_semantics<arbitrary>], iteration_bounds = array<i64: 2, 3, 2>, scalar_prefetch = 0 : i64, scratch_operands = 1 : i64, tpu.core_type = #tpu.core_type<tc>, window_params = [{transform_indices = @transform_0, window_bounds = array<i64: 1, 128, 128>}, {transform_indices = @transform_1, window_bounds = array<i64: 1, 128, 128>}, {transform_indices = @transform_2, window_bounds = array<i64: 1, 128, 1>}, {pipeline_mode = #tpu.pipeline_mode<synchronous>, transform_indices = @transform_3, window_bounds = array<i64: 1, 128>}, {transform_indices = @transform_4, window_bounds = array<i64: 128, 128>}]} {
    %c0_i32 = arith.constant 0 : i32
    %0 = arith.cmpi eq, %arg1, %c0_i32 : i32
    %c0_i32_0 = arith.constant 0 : i32
    %1 = arith.cmpi eq, %arg2, %c0_i32_0 : i32
    %2 = arith.andi %0, %1 : i1
    %3 = arith.extui %2 : i1 to i32
    %c0_i32_1 = arith.constant 0 : i32
    %4 = arith.cmpi ne, %3, %c0_i32_1 : i32
    scf.if %4 {
      %c0_14 = arith.constant 0 : index
      %c0_15 = arith.constant 0 : index
      %21 = vector.load %arg6[%c0_14, %c0_15] : memref<1x128xf32, #tpu.memory_space<vmem>>, vector<1x128xf32>
      %22 = vector.shape_cast %21 : vector<1x128xf32> to vector<1x128xf32>
      %23 = vector.broadcast %22 : vector<1x128xf32> to vector<128x128xf32>
      %c0_16 = arith.constant 0 : index
      %c0_17 = arith.constant 0 : index
      %24 = vector.load %arg7[%c0_16, %c0_17] : memref<128x128xf32, #tpu.memory_space<vmem>>, vector<128x128xf32>
      tpu.vector_store %arg7[%c0_16, %c0_17], %23 {strides = array<i32>} : memref<128x128xf32, #tpu.memory_space<vmem>>, vector<128x128xf32>,
    } else {
    }
    %c0_i32_2 = arith.constant 0 : i32
    %5 = arith.cmpi eq, %arg2, %c0_i32_2 : i32
    %6 = arith.extui %5 : i1 to i32
    %c0_i32_3 = arith.constant 0 : i32
    %7 = arith.cmpi ne, %6, %c0_i32_3 : i32
    scf.if %7 {
      %cst_14 = arith.constant 0.000000e+00 : f32
      %21 = vector.broadcast %cst_14 : f32 to vector<128x128xf32>
      %c0_15 = arith.constant 0 : index
      %c0_16 = arith.constant 0 : index
      %22 = vector.load %arg8[%c0_15, %c0_16] : memref<128x128xf32, #tpu.memory_space<vmem>>, vector<128x128xf32>
      tpu.vector_store %arg8[%c0_15, %c0_16], %21 {strides = array<i32>} : memref<128x128xf32, #tpu.memory_space<vmem>>, vector<128x128xf32>,
    } else {
    }
    %c0 = arith.constant 0 : index
    %c0_4 = arith.constant 0 : index
    %c0_5 = arith.constant 0 : index
    %8 = vector.load %arg3[%c0, %c0_4, %c0_5] : memref<1x128x128xi8, #tpu.memory_space<vmem>>, vector<1x128x128xi8>
    %9 = vector.shape_cast %8 : vector<1x128x128xi8> to vector<128x128xi8>
    %10 = arith.sitofp %9 : vector<128x128xi8> to vector<128x128xf32>
    %11 = arith.truncf %10 : vector<128x128xf32> to vector<128x128xbf16>
    %c0_6 = arith.constant 0 : index
    %c0_7 = arith.constant 0 : index
    %12 = vector.load %arg8[%c0_6, %c0_7] : memref<128x128xf32, #tpu.memory_space<vmem>>, vector<128x128xf32>
    %c0_8 = arith.constant 0 : index
    %c0_9 = arith.constant 0 : index
    %c0_10 = arith.constant 0 : index
    %13 = vector.load %arg4[%c0_8, %c0_9, %c0_10] : memref<1x128x128xbf16, #tpu.memory_space<vmem>>, vector<1x128x128xbf16>
    %14 = vector.shape_cast %13 : vector<1x128x128xbf16> to vector<128x128xbf16>
    %cst = arith.constant dense<0.000000e+00> : vector<128x128xf32>
    %15 = tpu.matmul %11, %14, %cst {dimension_numbers = #tpu.dot_dimension_numbers<[1], [0], [0], [1], [0, 0, 1, 1], [], []>} : vector<128x128xbf16>, vector<128x128xbf16>, vector<128x128xf32> -> vector<128x128xf32>
    %16 = arith.addf %12, %15 : vector<128x128xf32>
    %c0_11 = arith.constant 0 : index
    %c0_12 = arith.constant 0 : index
    %17 = vector.load %arg8[%c0_11, %c0_12] : memref<128x128xf32, #tpu.memory_space<vmem>>, vector<128x128xf32>
    tpu.vector_store %arg8[%c0_11, %c0_12], %16 {strides = array<i32>} : memref<128x128xf32, #tpu.memory_space<vmem>>, vector<128x128xf32>,
    %c1_i32 = arith.constant 1 : i32
    %18 = arith.cmpi eq, %arg2, %c1_i32 : i32
    %19 = arith.extui %18 : i1 to i32
    %c0_i32_13 = arith.constant 0 : i32
    %20 = arith.cmpi ne, %19, %c0_i32_13 : i32
    scf.if %20 {
      %c0_14 = arith.constant 0 : index
      %c0_15 = arith.constant 0 : index
      %21 = vector.load %arg7[%c0_14, %c0_15] : memref<128x128xf32, #tpu.memory_space<vmem>>, vector<128x128xf32>
      %c0_16 = arith.constant 0 : index
      %c0_17 = arith.constant 0 : index
      %c0_18 = arith.constant 0 : index
      %22 = vector.load %arg5[%c0_16, %c0_17, %c0_18] : memref<1x128x1xf32, #tpu.memory_space<vmem>>, vector<1x128x1xf32>
      %23 = vector.shape_cast %22 : vector<1x128x1xf32> to vector<128x1xf32>
      %c0_19 = arith.constant 0 : index
      %c0_20 = arith.constant 0 : index
      %24 = vector.load %arg8[%c0_19, %c0_20] : memref<128x128xf32, #tpu.memory_space<vmem>>, vector<128x128xf32>
      %25 = vector.broadcast %23 : vector<128x1xf32> to vector<128x128xf32>
      %26 = arith.mulf %25, %24 : vector<128x128xf32>
      %27 = arith.addf %21, %26 : vector<128x128xf32>
      %c0_21 = arith.constant 0 : index
      %c0_22 = arith.constant 0 : index
      %28 = vector.load %arg7[%c0_21, %c0_22] : memref<128x128xf32, #tpu.memory_space<vmem>>, vector<128x128xf32>
      tpu.vector_store %arg7[%c0_21, %c0_22], %27 {strides = array<i32>} : memref<128x128xf32, #tpu.memory_space<vmem>>, vector<128x128xf32>,
    } else {
    }
    return
  }
  func.func @transform_0(%arg0: i32, %arg1: i32, %arg2: i32) -> (i32, i32, i32) {
    %c0_i32 = arith.constant 0 : i32
    return %arg1, %arg0, %arg2 : i32, i32, i32
  }
  func.func @transform_1(%arg0: i32, %arg1: i32, %arg2: i32) -> (i32, i32, i32) {
    %c0_i32 = arith.constant 0 : i32
    %c0_i32_0 = arith.constant 0 : i32
    return %arg1, %arg2, %c0_i32 : i32, i32, i32
  }
  func.func @transform_2(%arg0: i32, %arg1: i32, %arg2: i32) -> (i32, i32, i32) {
    %c0_i32 = arith.constant 0 : i32
    %c0_i32_0 = arith.constant 0 : i32
    return %arg1, %arg0, %c0_i32 : i32, i32, i32
  }
  func.func @transform_3(%arg0: i32, %arg1: i32, %arg2: i32) -> (i32, i32) {
    %c0_i32 = arith.constant 0 : i32
    %c0_i32_0 = arith.constant 0 : i32
    %c0_i32_1 = arith.constant 0 : i32
    return %c0_i32, %c0_i32_0 : i32, i32
  }
  func.func @transform_4(%arg0: i32, %arg1: i32, %arg2: i32) -> (i32, i32) {
    %c0_i32 = arith.constant 0 : i32
    %c0_i32_0 = arith.constant 0 : i32
    return %arg0, %c0_i32 : i32, i32
  }
}

</mosaic_0001>

<llo_original>
// kernel: rgcn_forward.2
$region0: #{rgcn_forward.2}
  #allocation0 [shape = 'u32[]', space=smem, size = 0x4, offset = 0x4, fixed_abs, tag = 'smem constant byte address 0x4 - core index']
  #allocation1 [shape = 'u32[72,128]{1,0:T(1,128)}', space=vmem, size = 0x9000, scoped, tag = 'internal scratch']
  #allocation2 [shape = 'f32[128,128]{1,0:T(8,128)}', space=vmem, size = 0x10000, scoped, tag = 'scratch operand']
  %s0 = inlined_call_operand.vmem [shape: s8[3,256,256], index: 0, kind: input, shape index: {}]
  %s1 = inlined_call_operand.vmem [shape: bf16[3,256,128], index: 1, kind: input, shape index: {}]
  %s2 = inlined_call_operand.vmem [shape: f32[3,256,1], index: 2, kind: input, shape index: {}]
  %s3 = inlined_call_operand.vmem [shape: f32[1,128], index: 3, kind: input, shape index: {}]
  %s4 = inlined_call_operand.vmem [shape: f32[256,128], index: 4, kind: output, shape index: {}]
  %s5 = sld [smem:[#allocation0]]
  $region103: #{rgcn_forward.2} parent=0
    _
  %s7 = ssub.s32 1, %s5
  %s8 = scalar_select 0, %s7, %s5
  $region1: #{rgcn_forward.2} parent=0
    #allocation3 [shape = 'u8[32768]{0}', space=vmem, size = 0x8000, scoped, tag = 'input window, operand 0']
    loop: start=0, step=1, limit=14
    $region2: #{rgcn_forward.2} parent=1 // loop_pre_header
      _
    $region3: #{rgcn_forward.2} parent=1 // loop_header
      %s10 = sphi 0, %s14
      %p11 = scmp.ge.s32.totalorder %s10, 14
      %s17 = sphi 0, %s36
      %s18 = sphi 0, %s32
      %s19 = sphi 0, %s28
      %s20 = sphi 0, %s17
      %s21 = sphi 0, %s18
      %s22 = sphi 0, %s19
      %s23 = sphi 0, %s20
      %s24 = sphi 0, %s21
      %s25 = sphi 0, %s22
      %s43 = sphi 0, %s45
      %s46 = sphi 0, %s43
      %s47 = sphi 0, %s46
      %s63 = sphi 0, %s47
      %s71 = sphi 0, %s73
      %s74 = sphi 0, %s71
      %s75 = sphi 0, %s74
      %s91 = sphi 0, %s75
      %s99 = sphi 0, %s101
      %s102 = sphi 0, %s99
      %s103 = sphi 0, %s102
      %s119 = sphi 0, %s103
      %s123 = sphi 0, %s123
      %s125 = sphi 0, %s123
      %s126 = sphi 0, %s125
      %s140 = sphi 0, %s126
      %s146 = sphi 0, %s148
      %s149 = sphi 0, %s146
      %s150 = sphi 0, %s149
      %s166 = sphi 0, %s150
    $region4: #{rgcn_forward.2} parent=1 // loop_header_branch
      %13 = sbr.rel (%p11) target = $region8
    $region5: #{rgcn_forward.2} parent=1 // loop_body
      %s15 = ssub.s32 %s10, 1
      %s16 = ssub.s32 %s10, 2
      %s26 = sadd.s32 1, %s19
      %p27 = scmp.ge.s32.totalorder %s26, 2
      %s28 = scalar_select %p27, 0, %s26
      %s29 = sadd.s32 1, %s18
      %s30 = scalar_select %p27, %s29, %s18
      %p31 = scmp.ge.s32.totalorder %s30, 3
      %s32 = scalar_select %p31, 0, %s30
      %s33 = sadd.s32 1, %s17
      %s34 = scalar_select %p31, %s33, %s17
      %p35 = scmp.ge.s32.totalorder %s34, 2
      %s36 = scalar_select %p35, 0, %s34
      %s37 = ssub.s32 %s18, %s32
      %s38 = ssub.s32 %s17, %s36
      %s39 = sor.u32 %s37, %s38
      %s40 = ssub.s32 %s19, %s28
      %s41 = sor.u32 %s39, %s40
      %p42 = scmp.eq.s32.totalorder %s41, 0
      %s44 = sadd.s32 %s43, 1
      %s45 = scalar_select %p42, %s43, %s44
      %p48 = pneg %p42
      %p49 = scmp.eq.s32.totalorder %s10, 11
      %p50 = por %p48, %p49
      %p51 = scmp.ne.s32.totalorder %s43, %s46
      %p52 = scmp.eq.s32.totalorder %s10, 0
      %p53 = por %p51, %p52
      %p54 = scmp.ne.s32.totalorder %s43, %s46
      %p55 = scmp.eq.s32.totalorder %s15, 11
      %p56 = por %p54, %p55
      %p57 = scmp.ne.s32.totalorder %s46, %s47
      %p58 = scmp.eq.s32.totalorder %s15, 0
      %p59 = por %p57, %p58
      %p60 = scmp.ne.s32.totalorder %s46, %s47
      %p61 = scmp.eq.s32.totalorder %s16, 11
      %p62 = por %p60, %p61
      %p64 = scmp.ne.s32.totalorder %s47, %s63
      %p65 = scmp.eq.s32.totalorder %s16, 0
      %p66 = por %p64, %p65
      %s67 = ssub.s32 %s18, %s32
      %s68 = ssub.s32 %s19, %s28
      %s69 = sor.u32 %s67, %s68
      %p70 = scmp.eq.s32.totalorder %s69, 0
      %s72 = sadd.s32 %s71, 1
      %s73 = scalar_select %p70, %s71, %s72
      %p76 = pneg %p70
      %p77 = scmp.eq.s32.totalorder %s10, 11
      %p78 = por %p76, %p77
      %p79 = scmp.ne.s32.totalorder %s71, %s74
      %p80 = scmp.eq.s32.totalorder %s10, 0
      %p81 = por %p79, %p80
      %p82 = scmp.ne.s32.totalorder %s71, %s74
      %p83 = scmp.eq.s32.totalorder %s15, 11
      %p84 = por %p82, %p83
      %p85 = scmp.ne.s32.totalorder %s74, %s75
      %p86 = scmp.eq.s32.totalorder %s15, 0
      %p87 = por %p85, %p86
      %p88 = scmp.ne.s32.totalorder %s74, %s75
      %p89 = scmp.eq.s32.totalorder %s16, 11
      %p90 = por %p88, %p89
      %p92 = scmp.ne.s32.totalorder %s75, %s91
      %p93 = scmp.eq.s32.totalorder %s16, 0
      %p94 = por %p92, %p93
      %s95 = ssub.s32 %s18, %s32
      %s96 = ssub.s32 %s17, %s36
      %s97 = sor.u32 %s95, %s96
      %p98 = scmp.eq.s32.totalorder %s97, 0
      %s100 = sadd.s32 %s99, 1
      %s101 = scalar_select %p98, %s99, %s100
      %p104 = pneg %p98
      %p105 = scmp.eq.s32.totalorder %s10, 11
      %p106 = por %p104, %p105
      %p107 = scmp.ne.s32.totalorder %s99, %s102
      %p108 = scmp.eq.s32.totalorder %s10, 0
      %p109 = por %p107, %p108
      %p110 = scmp.ne.s32.totalorder %s99, %s102
      %p111 = scmp.eq.s32.totalorder %s15, 11
      %p112 = por %p110, %p111
      %p113 = scmp.ne.s32.totalorder %s102, %s103
      %p114 = scmp.eq.s32.totalorder %s15, 0
      %p115 = por %p113, %p114
      %p116 = scmp.ne.s32.totalorder %s102, %s103
      %p117 = scmp.eq.s32.totalorder %s16, 11
      %p118 = por %p116, %p117
      %p120 = scmp.ne.s32.totalorder %s103, %s119
      %p121 = scmp.eq.s32.totalorder %s16, 0
      %p122 = por %p120, %p121
      %s124 = sadd.s32 %s123, 1
      %p127 = scmp.eq.s32.totalorder %s10, 11
      %p128 = scmp.ne.s32.totalorder %s123, %s125
      %p129 = scmp.eq.s32.totalorder %s10, 0
      %p130 = por %p128, %p129
      %p131 = scmp.ne.s32.totalorder %s123, %s125
      %p132 = scmp.eq.s32.totalorder %s15, 11
      %p133 = por %p131, %p132
      %p134 = scmp.ne.s32.totalorder %s125, %s126
      %p135 = scmp.eq.s32.totalorder %s15, 0
      %p136 = por %p134, %p135
      %p137 = scmp.ne.s32.totalorder %s125, %s126
      %p138 = scmp.eq.s32.totalorder %s16, 11
      %p139 = por %p137, %p138
      %p141 = scmp.ne.s32.totalorder %s126, %s140
      %p142 = scmp.eq.s32.totalorder %s16, 0
      %p143 = por %p141, %p142
      %s144 = ssub.s32 %s17, %s36
      %p145 = scmp.eq.s32.totalorder %s144, 0
      %s147 = sadd.s32 %s146, 1
      %s148 = scalar_select %p145, %s146, %s147
      %p151 = pneg %p145
      %p152 = scmp.eq.s32.totalorder %s10, 11
      %p153 = por %p151, %p152
      %p154 = scmp.ne.s32.totalorder %s146, %s149
      %p155 = scmp.eq.s32.totalorder %s10, 0
      %p156 = por %p154, %p155
      %p157 = scmp.ne.s32.totalorder %s146, %s149
      %p158 = scmp.eq.s32.totalorder %s15, 11
      %p159 = por %p157, %p158
      %p160 = scmp.ne.s32.totalorder %s149, %s150
      %p161 = scmp.eq.s32.totalorder %s15, 0
      %p162 = por %p160, %p161
      %p163 = scmp.ne.s32.totalorder %s149, %s150
      %p164 = scmp.eq.s32.totalorder %s16, 11
      %p165 = por %p163, %p164
      %p167 = scmp.ne.s32.totalorder %s150, %s166
      %p168 = scmp.eq.s32.totalorder %s16, 0
      %p169 = por %p167, %p168
      %p170 = scmp.le.s32.totalorder 1, %s10
      %p171 = scmp.lt.s32.totalorder %s10, 13
      %p172 = pnand %p170, %p171
      %p173 = pneg %p172
      // Predicated region
      $region9: #{rgcn_forward.2} parent=5 // pred_check
        _
      $region10: #{rgcn_forward.2} parent=5 // pred_check_branch
        %175 = sbr.rel (%p172) target = $region12
      $region11: #{rgcn_forward.2} parent=5 // pred_region
        %s176 = ssub.s32 %s10, 1
        // Predicated region
        $region13: #{rgcn_forward.2} parent=11 // pred_check
          %p177 = pneg %p136
        $region14: #{rgcn_forward.2} parent=11 // pred_check_branch
          %179 = sbr.rel (%p177) target = $region16
        $region15: #{rgcn_forward.2} parent=11 // pred_region
          _
        $region16: #{rgcn_forward.2} parent=11 // pred_fallthru
          _
      $region12: #{rgcn_forward.2} parent=5 // pred_fallthru
        _
      %p180 = scmp.lt.s32.totalorder %s10, 12
      // Predicated region
      $region17: #{rgcn_forward.2} parent=5 // pred_check
        %p181 = pneg %p180
      $region18: #{rgcn_forward.2} parent=5 // pred_check_branch
        %183 = sbr.rel (%p181) target = $region20
      $region19: #{rgcn_forward.2} parent=5 // pred_region
        // Predicated region
        $region21: #{rgcn_forward.2} parent=19 // pred_check
          %p184 = pneg %p53
        $region22: #{rgcn_forward.2} parent=19 // pred_check_branch
          %186 = sbr.rel (%p184) target = $region24
        $region23: #{rgcn_forward.2} parent=19 // pred_region
          %s187 = sand.u32 %s43, 1
          %s188 = sand.u32 %s43, 1
          %s189 = smul.addr %s188, 32
          %s190 = scalar_lea.vmem [#allocation3], %s189
          %s191 = smul.u32 4, %s17
          %s192 = smul.addr %s191, 2
          %s193 = sadd.s32 %s19, %s192
          %s194 = smul.addr %s18, 16
          %s195 = sadd.s32 %s193, %s194
          %s196 = smul.addr %s195, 8
          %s197 = scalar_lea.vmem %s0, %s196
          // Predicated region
          $region25: #{rgcn_forward.2} parent=23 // pred_check
            _
          $region26: #{rgcn_forward.2} parent=23 // pred_check_branch
            %199 = sbr.rel (0) target = $region28
          $region27: #{rgcn_forward.2} parent=23 // pred_region
            // Predicated region
            $region29: #{rgcn_forward.2} parent=27 // pred_check
              _
            $region30: #{rgcn_forward.2} parent=27 // pred_check_branch
              %201 = sbr.rel (0) target = $region32
            $region31: #{rgcn_forward.2} parent=27 // pred_region
              // Predicated region
              $region44: #{rgcn_forward.2} parent=31 // pred_check
                _
              $region45: #{rgcn_forward.2} parent=31 // pred_check_branch
                %223 = sbr.rel (0) target = $region47
              $region46: #{rgcn_forward.2} parent=31 // pred_region
                loop: start=0, step=1, limit=1
                $region48: #{rgcn_forward.2} parent=46 // loop_pre_header
                  _
                $region49: #{rgcn_forward.2} parent=46 // loop_header
                  %s225 = sphi 0, %s229
                  %p226 = scmp.ge.s32.totalorder %s225, 1
                  %s230 = sphi %s197, %s197
                  %s231 = sphi %s190, %s190
                $region50: #{rgcn_forward.2} parent=46 // loop_header_branch
                  %228 = sbr.rel (%p226) target = $region54
                $region51: #{rgcn_forward.2} parent=46 // loop_body
                  %v232 = vld [vmem:[%s230] sm:$0xff]
                  %233 = vst [vmem:[%s231] sm:$0xff] %v232
                  %v234 = vld [vmem:[%s230 + $0x10] sm:$0xff]
                  %235 = vst [vmem:[%s231 + $0x8] sm:$0xff] %v234
                  %v236 = vld [vmem:[%s230 + $0x20] sm:$0xff]
                  %237 = vst [vmem:[%s231 + $0x10] sm:$0xff] %v236
                  %v238 = vld [vmem:[%s230 + $0x30] sm:$0xff]
                  %239 = vst [vmem:[%s231 + $0x18] sm:$0xff] %v238
                $region52: #{rgcn_forward.2} parent=46 // loop_footer
                  %s229 = sadd.s32 1, %s225
                $region53: #{rgcn_forward.2} parent=46 // loop_footer_branch
                  %224 = sbr.rel target = $region49
                $region54: #{rgcn_forward.2} parent=46 // loop_exit
                  _
              $region47: #{rgcn_forward.2} parent=31 // pred_fallthru
                _
              // Predicated region
              $region55: #{rgcn_forward.2} parent=31 // pred_check
                _
              $region56: #{rgcn_forward.2} parent=31 // pred_check_branch
                %241 = sbr.rel target = $region58
              $region57: #{rgcn_forward.2} parent=31 // pred_region
                _
              $region58: #{rgcn_forward.2} parent=31 // pred_fallthru
                _
            $region32: #{rgcn_forward.2} parent=27 // pred_fallthru
              _
            // Predicated region
            $region33: #{rgcn_forward.2} parent=27 // pred_check
              _
            $region34: #{rgcn_forward.2} parent=27 // pred_check_branch
              %203 = sbr.rel target = $region36
            $region35: #{rgcn_forward.2} parent=27 // pred_region
              %s205 = ssub.s32 256, 1
              loop: start=0, step=1, limit=1
              $region37: #{rgcn_forward.2} parent=35 // loop_pre_header
                _
              $region38: #{rgcn_forward.2} parent=35 // loop_header
                %s207 = sphi 0, %s211
                %p208 = scmp.ge.s32.totalorder %s207, 1
                %s212 = sphi %s197, %s197
                %s213 = sphi %s190, %s190
              $region39: #{rgcn_forward.2} parent=35 // loop_header_branch
                %210 = sbr.rel (%p208) target = $region43
              $region40: #{rgcn_forward.2} parent=35 // loop_body
                %v214 = vld [vmem:[%s212] sm:%s205]
                %215 = vst [vmem:[%s213] sm:%s205] %v214
                %v216 = vld [vmem:[%s212 + $0x10] sm:%s205]
                %217 = vst [vmem:[%s213 + $0x8] sm:%s205] %v216
                %v218 = vld [vmem:[%s212 + $0x20] sm:%s205]
                %219 = vst [vmem:[%s213 + $0x10] sm:%s205] %v218
                %v220 = vld [vmem:[%s212 + $0x30] sm:%s205]
                %221 = vst [vmem:[%s213 + $0x18] sm:%s205] %v220
              $region41: #{rgcn_forward.2} parent=35 // loop_footer
                %s211 = sadd.s32 1, %s207
              $region42: #{rgcn_forward.2} parent=35 // loop_footer_branch
                %206 = sbr.rel target = $region38
              $region43: #{rgcn_forward.2} parent=35 // loop_exit
                _
            $region36: #{rgcn_forward.2} parent=27 // pred_fallthru
              _
          $region28: #{rgcn_forward.2} parent=23 // pred_fallthru
            _
          %242 = vnop
        $region24: #{rgcn_forward.2} parent=19 // pred_fallthru
          _
        // Predicated region
        $region59: #{rgcn_forward.2} parent=19 // pred_check
          %p243 = pneg %p81
        $region60: #{rgcn_forward.2} parent=19 // pred_check_branch
          %245 = sbr.rel (%p243) target = $region62
        $region61: #{rgcn_forward.2} parent=19 // pred_region
          %s246 = smul.u32 16, %s19
          %p247 = scmp.lt.s32.totalorder %s18, 2
          %s248 = scalar_select %p247, %s18, 2
          %p249 = scmp.lt.s32.totalorder %s246, 31
          %s250 = scalar_select %p249, %s246, 31
          %s251 = smul.addr %s248, 32
          %s252 = sadd.s32 %s250, %s251
          %s253 = smul.addr %s252, 4
          %s254 = scalar_lea.vmem %s1, %s253
          %s255 = smul.u32 16, %s19
        $region62: #{rgcn_forward.2} parent=19 // pred_fallthru
          _
        // Predicated region
        $region63: #{rgcn_forward.2} parent=19 // pred_check
          %p256 = pneg %p109
        $region64: #{rgcn_forward.2} parent=19 // pred_check_branch
          %258 = sbr.rel (%p256) target = $region66
        $region65: #{rgcn_forward.2} parent=19 // pred_region
          %s259 = smul.u32 16, %s17
          %p260 = scmp.lt.s32.totalorder %s18, 2
          %s261 = scalar_select %p260, %s18, 2
          %p262 = scmp.lt.s32.totalorder %s259, 31
          %s263 = scalar_select %p262, %s259, 31
          %s264 = smul.addr %s261, 32
          %s265 = sadd.s32 %s263, %s264
          %s266 = smul.addr %s265, 8
          %s267 = scalar_lea.vmem %s2, %s266
          %s268 = smul.u32 16, %s17
        $region66: #{rgcn_forward.2} parent=19 // pred_fallthru
          _
      $region20: #{rgcn_forward.2} parent=5 // pred_fallthru
        _
      %p269 = scmp.le.s32.totalorder 1, %s10
      %p270 = scmp.lt.s32.totalorder %s10, 13
      %p271 = pnand %p269, %p270
      %p272 = pneg %p271
      // Predicated region
      $region67: #{rgcn_forward.2} parent=5 // pred_check
        _
      $region68: #{rgcn_forward.2} parent=5 // pred_check_branch
        %274 = sbr.rel (%p271) target = $region70
      $region69: #{rgcn_forward.2} parent=5 // pred_region
        %s275 = ssub.s32 %s10, 1
        %s276 = sand.u32 %s46, 1
        %s277 = sand.u32 %s46, 1
        %s278 = smul.addr %s277, 32
        %s279 = scalar_lea.vmem [#allocation3], %s278
        // Predicated region
        $region71: #{rgcn_forward.2} parent=69 // pred_check
          %p280 = pneg %p59
        $region72: #{rgcn_forward.2} parent=69 // pred_check_branch
          %282 = sbr.rel (%p280) target = $region74
        $region73: #{rgcn_forward.2} parent=69 // pred_region
          _
        $region74: #{rgcn_forward.2} parent=69 // pred_fallthru
          _
        %s283 = sand.u32 %s46, 1
        %s284 = sand.u32 %s46, 1
        %s285 = smul.addr %s284, 32
        %s286 = scalar_lea.vmem [#allocation3], %s285
        %p287 = pneg %p59
        %p288 = pneg %p56
        %s289 = smul.u32 16, %s22
        %p290 = scmp.lt.s32.totalorder %s21, 2
        %s291 = scalar_select %p290, %s21, 2
        %p292 = scmp.lt.s32.totalorder %s289, 31
        %s293 = scalar_select %p292, %s289, 31
        %s294 = smul.addr %s291, 32
        %s295 = sadd.s32 %s293, %s294
        %s296 = smul.addr %s295, 4
        %s297 = scalar_lea.vmem %s1, %s296
        %p298 = pneg %p87
        %p299 = pneg %p84
        %s300 = smul.u32 16, %s20
        %p301 = scmp.lt.s32.totalorder %s21, 2
        %s302 = scalar_select %p301, %s21, 2
        %p303 = scmp.lt.s32.totalorder %s300, 31
        %s304 = scalar_select %p303, %s300, 31
        %s305 = smul.addr %s302, 32
        %s306 = sadd.s32 %s304, %s305
        %s307 = smul.addr %s306, 8
        %s308 = scalar_lea.vmem %s2, %s307
        %p309 = pneg %p115
        %p310 = pneg %p112
        %p311 = pneg %p136
        %p312 = pneg %p133
        %p313 = pneg %p162
        %p314 = pneg %p159
        %s315 = smul.u32 16, %s20
        %p316 = scmp.lt.s32.totalorder %s315, 31
        %s317 = scalar_select %p316, %s315, 31
        %s318 = smul.addr %s317, 8
        %s319 = scalar_lea.vmem %s4, %s318
        %s320 = smul.u32 4, %s20
        %s321 = smul.u32 16, %s22
        %p322 = scmp.lt.s32.totalorder %s21, 2
        %s323 = scalar_select %p322, %s21, 2
        %p324 = scmp.lt.s32.totalorder %s321, 31
        %s325 = scalar_select %p324, %s321, 31
        %s326 = smul.addr %s323, 32
        %s327 = sadd.s32 %s325, %s326
        %s328 = smul.addr %s327, 4
        %s329 = scalar_lea.vmem %s1, %s328
        %s330 = smul.u32 16, %s22
        %s331 = smul.u32 16, %s20
        %p332 = scmp.lt.s32.totalorder %s21, 2
        %s333 = scalar_select %p332, %s21, 2
        %p334 = scmp.lt.s32.totalorder %s331, 31
        %s335 = scalar_select %p334, %s331, 31
        %s336 = smul.addr %s333, 32
        %s337 = sadd.s32 %s335, %s336
        %s338 = smul.addr %s337, 8
        %s339 = scalar_lea.vmem %s2, %s338
        %s340 = smul.u32 16, %s20
        %s341 = smul.u32 16, %s20
        %p342 = scmp.lt.s32.totalorder %s341, 31
        %s343 = scalar_select %p342, %s341, 31
        %s344 = smul.addr %s343, 8
        %s345 = scalar_lea.vmem %s4, %s344
        %s346 = smul.u32 16, %s20
        %p347 = scmp.eq.s32.totalorder %s21, 0
        %p348 = scmp.eq.s32.totalorder %s22, 0
        %p349 = pnand %p347, %p348
        %p350 = pneg %p349
        // Predicated region
        $region75: #{rgcn_forward.2} parent=69 // pred_check
          _
        $region76: #{rgcn_forward.2} parent=69 // pred_check_branch
          %352 = sbr.rel (%p349) target = $region78
        $region77: #{rgcn_forward.2} parent=69 // pred_region
          %v353 = vld [vmem:[%s3] sm:$0x1]
          %v355 = vperm.slane %v353, 0
          %357 = vst [vmem:[%s345] sm:$0xff] %v355
          %358 = vst [vmem:[%s345 + $0x8] sm:$0xff] %v355
          %359 = vst [vmem:[%s345 + $0x10] sm:$0xff] %v355
          %360 = vst [vmem:[%s345 + $0x18] sm:$0xff] %v355
          %361 = vst [vmem:[%s345 + $0x20] sm:$0xff] %v355
          %362 = vst [vmem:[%s345 + $0x28] sm:$0xff] %v355
          %363 = vst [vmem:[%s345 + $0x30] sm:$0xff] %v355
          %364 = vst [vmem:[%s345 + $0x38] sm:$0xff] %v355
          %365 = vst [vmem:[%s345 + $0x40] sm:$0xff] %v355
          %366 = vst [vmem:[%s345 + $0x48] sm:$0xff] %v355
          %367 = vst [vmem:[%s345 + $0x50] sm:$0xff] %v355
          %368 = vst [vmem:[%s345 + $0x58] sm:$0xff] %v355
          %369 = vst [vmem:[%s345 + $0x60] sm:$0xff] %v355
          %370 = vst [vmem:[%s345 + $0x68] sm:$0xff] %v355
          %371 = vst [vmem:[%s345 + $0x70] sm:$0xff] %v355
          %372 = vst [vmem:[%s345 + $0x78] sm:$0xff] %v355
        $region78: #{rgcn_forward.2} parent=69 // pred_fallthru
          _
        // Predicated region
        $region79: #{rgcn_forward.2} parent=69 // pred_check
          %p373 = pneg %p348
        $region80: #{rgcn_forward.2} parent=69 // pred_check_branch
          %375 = sbr.rel (%p373) target = $region82
        $region81: #{rgcn_forward.2} parent=69 // pred_region
          %376 = vst [vmem:[#allocation2] sm:$0xff] 0.0
          %377 = vst [vmem:[#allocation2 + $0x8] sm:$0xff] 0.0
          %378 = vst [vmem:[#allocation2 + $0x10] sm:$0xff] 0.0
          %379 = vst [vmem:[#allocation2 + $0x18] sm:$0xff] 0.0
          %380 = vst [vmem:[#allocation2 + $0x20] sm:$0xff] 0.0
          %381 = vst [vmem:[#allocation2 + $0x28] sm:$0xff] 0.0
          %382 = vst [vmem:[#allocation2 + $0x30] sm:$0xff] 0.0
          %383 = vst [vmem:[#allocation2 + $0x38] sm:$0xff] 0.0
          %384 = vst [vmem:[#allocation2 + $0x40] sm:$0xff] 0.0
          %385 = vst [vmem:[#allocation2 + $0x48] sm:$0xff] 0.0
          %386 = vst [vmem:[#allocation2 + $0x50] sm:$0xff] 0.0
          %387 = vst [vmem:[#allocation2 + $0x58] sm:$0xff] 0.0
          %388 = vst [vmem:[#allocation2 + $0x60] sm:$0xff] 0.0
          %389 = vst [vmem:[#allocation2 + $0x68] sm:$0xff] 0.0
          %390 = vst [vmem:[#allocation2 + $0x70] sm:$0xff] 0.0
          %391 = vst [vmem:[#allocation2 + $0x78] sm:$0xff] 0.0
        $region82: #{rgcn_forward.2} parent=69 // pred_fallthru
          _
        %v392 = vld [vmem:[%s279] sm:$0xff]
        %v393 = vld [vmem:[%s279 + $0x8] sm:$0xff]
        %v394 = vld [vmem:[%s279 + $0x10] sm:$0xff]
        %v395 = vld [vmem:[%s279 + $0x18] sm:$0xff]
        %v396 = vunpack.c.0.s8 %v392
        %v397 = vunpack.c.1.s8 %v392
        %v398 = vunpack.c.2.s8 %v392
        %v399 = vunpack.c.3.s8 %v392
        %v400 = vunpack.c.0.s8 %v393
        %v401 = vunpack.c.1.s8 %v393
        %v402 = vunpack.c.2.s8 %v393
        %v403 = vunpack.c.3.s8 %v393
        %v404 = vunpack.c.0.s8 %v394
        %v405 = vunpack.c.1.s8 %v394
        %v406 = vunpack.c.2.s8 %v394
        %v407 = vunpack.c.3.s8 %v394
        %v408 = vunpack.c.0.s8 %v395
        %v409 = vunpack.c.1.s8 %v395
        %v410 = vunpack.c.2.s8 %v395
        %v411 = vunpack.c.3.s8 %v395
        %v412 = vcvt.s32.f32 %v396
        %v413 = vcvt.s32.f32 %v397
        %v414 = vcvt.s32.f32 %v398
        %v415 = vcvt.s32.f32 %v399
        %v416 = vcvt.s32.f32 %v400
        %v417 = vcvt.s32.f32 %v401
        %v418 = vcvt.s32.f32 %v402
        %v419 = vcvt.s32.f32 %v403
        %v420 = vcvt.s32.f32 %v404
        %v421 = vcvt.s32.f32 %v405
        %v422 = vcvt.s32.f32 %v406
        %v423 = vcvt.s32.f32 %v407
        %v424 = vcvt.s32.f32 %v408
        %v425 = vcvt.s32.f32 %v409
        %v426 = vcvt.s32.f32 %v410
        %v427 = vcvt.s32.f32 %v411
        %v428 = vpack.c.bf16 %v413, %v412
        %v429 = vpack.c.bf16 %v415, %v414
        %v430 = vpack.c.bf16 %v417, %v416
        %v431 = vpack.c.bf16 %v419, %v418
        %v432 = vpack.c.bf16 %v421, %v420
        %v433 = vpack.c.bf16 %v423, %v422
        %v434 = vpack.c.bf16 %v425, %v424
        %v435 = vpack.c.bf16 %v427, %v426
        %v436 = vld [vmem:[#allocation2] sm:$0xff]
        %v437 = vld [vmem:[#allocation2 + $0x8] sm:$0xff]
        %v438 = vld [vmem:[#allocation2 + $0x10] sm:$0xff]
        %v439 = vld [vmem:[#allocation2 + $0x18] sm:$0xff]
        %v440 = vld [vmem:[#allocation2 + $0x20] sm:$0xff]
        %v441 = vld [vmem:[#allocation2 + $0x28] sm:$0xff]
        %v442 = vld [vmem:[#allocation2 + $0x30] sm:$0xff]
        %v443 = vld [vmem:[#allocation2 + $0x38] sm:$0xff]
        %v444 = vld [vmem:[#allocation2 + $0x40] sm:$0xff]
        %v445 = vld [vmem:[#allocation2 + $0x48] sm:$0xff]
        %v446 = vld [vmem:[#allocation2 + $0x50] sm:$0xff]
        %v447 = vld [vmem:[#allocation2 + $0x58] sm:$0xff]
        %v448 = vld [vmem:[#allocation2 + $0x60] sm:$0xff]
        %v449 = vld [vmem:[#allocation2 + $0x68] sm:$0xff]
        %v450 = vld [vmem:[#allocation2 + $0x70] sm:$0xff]
        %v451 = vld [vmem:[#allocation2 + $0x78] sm:$0xff]
        %v452 = vld [vmem:[%s329] sm:$0xf]
        %v453 = vld [vmem:[%s329 + $0x4] sm:$0xf]
        %v454 = vld [vmem:[%s329 + $0x8] sm:$0xf]
        %v455 = vld [vmem:[%s329 + $0xc] sm:$0xf]
        %v456 = vld [vmem:[%s329 + $0x10] sm:$0xf]
        %v457 = vld [vmem:[%s329 + $0x14] sm:$0xf]
        %v458 = vld [vmem:[%s329 + $0x18] sm:$0xf]
        %v459 = vld [vmem:[%s329 + $0x1c] sm:$0xf]
        %v460 = vld [vmem:[%s329 + $0x20] sm:$0xf]
        %v461 = vld [vmem:[%s329 + $0x24] sm:$0xf]
        %v462 = vld [vmem:[%s329 + $0x28] sm:$0xf]
        %v463 = vld [vmem:[%s329 + $0x2c] sm:$0xf]
        %v464 = vld [vmem:[%s329 + $0x30] sm:$0xf]
        %v465 = vld [vmem:[%s329 + $0x34] sm:$0xf]
        %v466 = vld [vmem:[%s329 + $0x38] sm:$0xf]
        %v467 = vld [vmem:[%s329 + $0x3c] sm:$0xf]
        %v484 = vunpack.c.l.b16 %v452
        %v485 = vunpack.c.l.b16 %v453
        %v486 = vunpack.c.l.b16 %v454
        %v487 = vunpack.c.l.b16 %v455
        %v488 = vunpack.c.l.b16 %v456
        %v489 = vunpack.c.l.b16 %v457
        %v490 = vunpack.c.l.b16 %v458
        %v491 = vunpack.c.l.b16 %v459
        %v492 = vunpack.c.l.b16 %v460
        %v493 = vunpack.c.l.b16 %v461
        %v494 = vunpack.c.l.b16 %v462
        %v495 = vunpack.c.l.b16 %v463
        %v496 = vunpack.c.l.b16 %v464
        %v497 = vunpack.c.l.b16 %v465
        %v498 = vunpack.c.l.b16 %v466
        %v499 = vunpack.c.l.b16 %v467
        %v500 = vpack.c.b16 %v485, %v484
        %v501 = vpack.c.b16 %v487, %v486
        %v502 = vpack.c.b16 %v489, %v488
        %v503 = vpack.c.b16 %v491, %v490
        %v504 = vpack.c.b16 %v493, %v492
        %v505 = vpack.c.b16 %v495, %v494
        %v506 = vpack.c.b16 %v497, %v496
        %v507 = vpack.c.b16 %v499, %v498
        %516 = vmatpush.bf16.msra.mxu0 %v507
        %517 = vmatpush.bf16.msra.mxu0 %v506
        %518 = vmatpush.bf16.msra.mxu0 %v505
        %519 = vmatpush.bf16.msra.mxu0 %v504
        %520 = vmatpush.bf16.msra.mxu0 %v503
        %521 = vmatpush.bf16.msra.mxu0 %v502
        %522 = vmatpush.bf16.msra.mxu0 %v501
        %523 = vmatpush.bf16.msra.mxu0 %v500
        %524 = vmatmul.bf16.gmra.mxu0 %v428
        %v525 = vpop.f32.mrf.mxu0
        %v526 = vadd.f32 0.0, %v525
        %v527 = vpop.f32.mrf.mxu0
        %v528 = vadd.f32 0.0, %v527
        %529 = vmatmul.bf16.gmra.mxu0 %v429
        %v530 = vpop.f32.mrf.mxu0
        %v531 = vadd.f32 0.0, %v530
        %v532 = vpop.f32.mrf.mxu0
        %v533 = vadd.f32 0.0, %v532
        %534 = vmatmul.bf16.gmra.mxu0 %v430
        %v535 = vpop.f32.mrf.mxu0
        %v536 = vadd.f32 0.0, %v535
        %v537 = vpop.f32.mrf.mxu0
        %v538 = vadd.f32 0.0, %v537
        %539 = vmatmul.bf16.gmra.mxu0 %v431
        %v540 = vpop.f32.mrf.mxu0
        %v541 = vadd.f32 0.0, %v540
        %v542 = vpop.f32.mrf.mxu0
        %v543 = vadd.f32 0.0, %v542
        %544 = vmatmul.bf16.gmra.mxu0 %v432
        %v545 = vpop.f32.mrf.mxu0
        %v546 = vadd.f32 0.0, %v545
        %v547 = vpop.f32.mrf.mxu0
        %v548 = vadd.f32 0.0, %v547
        %549 = vmatmul.bf16.gmra.mxu0 %v433
        %v550 = vpop.f32.mrf.mxu0
        %v551 = vadd.f32 0.0, %v550
        %v552 = vpop.f32.mrf.mxu0
        %v553 = vadd.f32 0.0, %v552
        %554 = vmatmul.bf16.gmra.mxu0 %v434
        %v555 = vpop.f32.mrf.mxu0
        %v556 = vadd.f32 0.0, %v555
        %v557 = vpop.f32.mrf.mxu0
        %v558 = vadd.f32 0.0, %v557
        %559 = vmatmul.bf16.gmra.mxu0 %v435
        %v560 = vpop.f32.mrf.mxu0
        %v561 = vadd.f32 0.0, %v560
        %v562 = vpop.f32.mrf.mxu0
        %v563 = vadd.f32 0.0, %v562
        %564 = vdwg.mxu0
        %v565 = vadd.f32 %v436, %v526
        %v566 = vadd.f32 %v437, %v528
        %v567 = vadd.f32 %v438, %v531
        %v568 = vadd.f32 %v439, %v533
        %v569 = vadd.f32 %v440, %v536
        %v570 = vadd.f32 %v441, %v538
        %v571 = vadd.f32 %v442, %v541
        %v572 = vadd.f32 %v443, %v543
        %v573 = vadd.f32 %v444, %v546
        %v574 = vadd.f32 %v445, %v548
        %v575 = vadd.f32 %v446, %v551
        %v576 = vadd.f32 %v447, %v553
        %v577 = vadd.f32 %v448, %v556
        %v578 = vadd.f32 %v449, %v558
        %v579 = vadd.f32 %v450, %v561
        %v580 = vadd.f32 %v451, %v563
        %581 = vst [vmem:[#allocation2] sm:$0xff] %v565
        %582 = vst [vmem:[#allocation2 + $0x8] sm:$0xff] %v566
        %583 = vst [vmem:[#allocation2 + $0x10] sm:$0xff] %v567
        %584 = vst [vmem:[#allocation2 + $0x18] sm:$0xff] %v568
        %585 = vst [vmem:[#allocation2 + $0x20] sm:$0xff] %v569
        %586 = vst [vmem:[#allocation2 + $0x28] sm:$0xff] %v570
        %587 = vst [vmem:[#allocation2 + $0x30] sm:$0xff] %v571
        %588 = vst [vmem:[#allocation2 + $0x38] sm:$0xff] %v572
        %589 = vst [vmem:[#allocation2 + $0x40] sm:$0xff] %v573
        %590 = vst [vmem:[#allocation2 + $0x48] sm:$0xff] %v574
        %591 = vst [vmem:[#allocation2 + $0x50] sm:$0xff] %v575
        %592 = vst [vmem:[#allocation2 + $0x58] sm:$0xff] %v576
        %593 = vst [vmem:[#allocation2 + $0x60] sm:$0xff] %v577
        %594 = vst [vmem:[#allocation2 + $0x68] sm:$0xff] %v578
        %595 = vst [vmem:[#allocation2 + $0x70] sm:$0xff] %v579
        %596 = vst [vmem:[#allocation2 + $0x78] sm:$0xff] %v580
        %p597 = scmp.eq.s32.totalorder %s22, 1
        // Predicated region
        $region83: #{rgcn_forward.2} parent=69 // pred_check
          %p598 = pneg %p597
        $region84: #{rgcn_forward.2} parent=69 // pred_check_branch
          %600 = sbr.rel (%p598) target = $region86
        $region85: #{rgcn_forward.2} parent=69 // pred_region
          %v601 = vld [vmem:[%s345] sm:$0xff]
          %v602 = vld [vmem:[%s345 + $0x8] sm:$0xff]
          %v603 = vld [vmem:[%s345 + $0x10] sm:$0xff]
          %v604 = vld [vmem:[%s345 + $0x18] sm:$0xff]
          %v605 = vld [vmem:[%s345 + $0x20] sm:$0xff]
          %v606 = vld [vmem:[%s345 + $0x28] sm:$0xff]
          %v607 = vld [vmem:[%s345 + $0x30] sm:$0xff]
          %v608 = vld [vmem:[%s345 + $0x38] sm:$0xff]
          %v609 = vld [vmem:[%s345 + $0x40] sm:$0xff]
          %v610 = vld [vmem:[%s345 + $0x48] sm:$0xff]
          %v611 = vld [vmem:[%s345 + $0x50] sm:$0xff]
          %v612 = vld [vmem:[%s345 + $0x58] sm:$0xff]
          %v613 = vld [vmem:[%s345 + $0x60] sm:$0xff]
          %v614 = vld [vmem:[%s345 + $0x68] sm:$0xff]
          %v615 = vld [vmem:[%s345 + $0x70] sm:$0xff]
          %v616 = vld [vmem:[%s345 + $0x78] sm:$0xff]
          %v617 = vld [vmem:[%s339] sm:$0xff]
          %v618 = vld [vmem:[%s339 + $0x8] sm:$0xff]
          %v619 = vld [vmem:[%s339 + $0x10] sm:$0xff]
          %v620 = vld [vmem:[%s339 + $0x18] sm:$0xff]
          %v621 = vld [vmem:[%s339 + $0x20] sm:$0xff]
          %v622 = vld [vmem:[%s339 + $0x28] sm:$0xff]
          %v623 = vld [vmem:[%s339 + $0x30] sm:$0xff]
          %v624 = vld [vmem:[%s339 + $0x38] sm:$0xff]
          %v625 = vld [vmem:[%s339 + $0x40] sm:$0xff]
          %v626 = vld [vmem:[%s339 + $0x48] sm:$0xff]
          %v627 = vld [vmem:[%s339 + $0x50] sm:$0xff]
          %v628 = vld [vmem:[%s339 + $0x58] sm:$0xff]
          %v629 = vld [vmem:[%s339 + $0x60] sm:$0xff]
          %v630 = vld [vmem:[%s339 + $0x68] sm:$0xff]
          %v631 = vld [vmem:[%s339 + $0x70] sm:$0xff]
          %v632 = vld [vmem:[%s339 + $0x78] sm:$0xff]
          %v633 = vld [vmem:[#allocation2] sm:$0xff]
          %v634 = vld [vmem:[#allocation2 + $0x8] sm:$0xff]
          %v635 = vld [vmem:[#allocation2 + $0x10] sm:$0xff]
          %v636 = vld [vmem:[#allocation2 + $0x18] sm:$0xff]
          %v637 = vld [vmem:[#allocation2 + $0x20] sm:$0xff]
          %v638 = vld [vmem:[#allocation2 + $0x28] sm:$0xff]
          %v639 = vld [vmem:[#allocation2 + $0x30] sm:$0xff]
          %v640 = vld [vmem:[#allocation2 + $0x38] sm:$0xff]
          %v641 = vld [vmem:[#allocation2 + $0x40] sm:$0xff]
          %v642 = vld [vmem:[#allocation2 + $0x48] sm:$0xff]
          %v643 = vld [vmem:[#allocation2 + $0x50] sm:$0xff]
          %v644 = vld [vmem:[#allocation2 + $0x58] sm:$0xff]
          %v645 = vld [vmem:[#allocation2 + $0x60] sm:$0xff]
          %v646 = vld [vmem:[#allocation2 + $0x68] sm:$0xff]
          %v647 = vld [vmem:[#allocation2 + $0x70] sm:$0xff]
          %v648 = vld [vmem:[#allocation2 + $0x78] sm:$0xff]
          %650 = vset.pattern.permute.xlu0 0
          %651 = vperm.xlu0 %650, %v617
          %v652 = vpop.permute.xlu0 %651
          %655 = vset.pattern.permute.xlu0 0
          %656 = vperm.xlu0 %655, %v618
          %v657 = vpop.permute.xlu0 %656
          %660 = vset.pattern.permute.xlu0 0
          %661 = vperm.xlu0 %660, %v619
          %v662 = vpop.permute.xlu0 %661
          %665 = vset.pattern.permute.xlu0 0
          %666 = vperm.xlu0 %665, %v620
          %v667 = vpop.permute.xlu0 %666
          %670 = vset.pattern.permute.xlu0 0
          %671 = vperm.xlu0 %670, %v621
          %v672 = vpop.permute.xlu0 %671
          %675 = vset.pattern.permute.xlu0 0
          %676 = vperm.xlu0 %675, %v622
          %v677 = vpop.permute.xlu0 %676
          %680 = vset.pattern.permute.xlu0 0
          %681 = vperm.xlu0 %680, %v623
          %v682 = vpop.permute.xlu0 %681
          %685 = vset.pattern.permute.xlu0 0
          %686 = vperm.xlu0 %685, %v624
          %v687 = vpop.permute.xlu0 %686
          %690 = vset.pattern.permute.xlu0 0
          %691 = vperm.xlu0 %690, %v625
          %v692 = vpop.permute.xlu0 %691
          %695 = vset.pattern.permute.xlu0 0
          %696 = vperm.xlu0 %695, %v626
          %v697 = vpop.permute.xlu0 %696
          %700 = vset.pattern.permute.xlu0 0
          %701 = vperm.xlu0 %700, %v627
          %v702 = vpop.permute.xlu0 %701
          %705 = vset.pattern.permute.xlu0 0
          %706 = vperm.xlu0 %705, %v628
          %v707 = vpop.permute.xlu0 %706
          %710 = vset.pattern.permute.xlu0 0
          %711 = vperm.xlu0 %710, %v629
          %v712 = vpop.permute.xlu0 %711
          %715 = vset.pattern.permute.xlu0 0
          %716 = vperm.xlu0 %715, %v630
          %v717 = vpop.permute.xlu0 %716
          %720 = vset.pattern.permute.xlu0 0
          %721 = vperm.xlu0 %720, %v631
          %v722 = vpop.permute.xlu0 %721
          %725 = vset.pattern.permute.xlu0 0
          %726 = vperm.xlu0 %725, %v632
          %v727 = vpop.permute.xlu0 %726
          %v729 = vmul.f32 %v652, %v633
          %v730 = vmul.f32 %v657, %v634
          %v731 = vmul.f32 %v662, %v635
          %v732 = vmul.f32 %v667, %v636
          %v733 = vmul.f32 %v672, %v637
          %v734 = vmul.f32 %v677, %v638
          %v735 = vmul.f32 %v682, %v639
          %v736 = vmul.f32 %v687, %v640
          %v737 = vmul.f32 %v692, %v641
          %v738 = vmul.f32 %v697, %v642
          %v739 = vmul.f32 %v702, %v643
          %v740 = vmul.f32 %v707, %v644
          %v741 = vmul.f32 %v712, %v645
          %v742 = vmul.f32 %v717, %v646
          %v743 = vmul.f32 %v722, %v647
          %v744 = vmul.f32 %v727, %v648
          %v745 = vadd.f32 %v601, %v729
          %v746 = vadd.f32 %v602, %v730
          %v747 = vadd.f32 %v603, %v731
          %v748 = vadd.f32 %v604, %v732
          %v749 = vadd.f32 %v605, %v733
          %v750 = vadd.f32 %v606, %v734
          %v751 = vadd.f32 %v607, %v735
          %v752 = vadd.f32 %v608, %v736
          %v753 = vadd.f32 %v609, %v737
          %v754 = vadd.f32 %v610, %v738
          %v755 = vadd.f32 %v611, %v739
          %v756 = vadd.f32 %v612, %v740
          %v757 = vadd.f32 %v613, %v741
          %v758 = vadd.f32 %v614, %v742
          %v759 = vadd.f32 %v615, %v743
          %v760 = vadd.f32 %v616, %v744
          %761 = vst [vmem:[%s345] sm:$0xff] %v745
          %762 = vst [vmem:[%s345 + $0x8] sm:$0xff] %v746
          %763 = vst [vmem:[%s345 + $0x10] sm:$0xff] %v747
          %764 = vst [vmem:[%s345 + $0x18] sm:$0xff] %v748
          %765 = vst [vmem:[%s345 + $0x20] sm:$0xff] %v749
          %766 = vst [vmem:[%s345 + $0x28] sm:$0xff] %v750
          %767 = vst [vmem:[%s345 + $0x30] sm:$0xff] %v751
          %768 = vst [vmem:[%s345 + $0x38] sm:$0xff] %v752
          %769 = vst [vmem:[%s345 + $0x40] sm:$0xff] %v753
          %770 = vst [vmem:[%s345 + $0x48] sm:$0xff] %v754
          %771 = vst [vmem:[%s345 + $0x50] sm:$0xff] %v755
          %772 = vst [vmem:[%s345 + $0x58] sm:$0xff] %v756
          %773 = vst [vmem:[%s345 + $0x60] sm:$0xff] %v757
          %774 = vst [vmem:[%s345 + $0x68] sm:$0xff] %v758
          %775 = vst [vmem:[%s345 + $0x70] sm:$0xff] %v759
          %776 = vst [vmem:[%s345 + $0x78] sm:$0xff] %v760
        $region86: #{rgcn_forward.2} parent=69 // pred_fallthru
          _
        %p777 = scmp.eq.s32.totalorder %s21, 2
        %p778 = pnand %p777, %p597
        %p779 = pneg %p778
        // Predicated region
        $region87: #{rgcn_forward.2} parent=69 // pred_check
          _
        $region88: #{rgcn_forward.2} parent=69 // pred_check_branch
          %781 = sbr.rel (%p778) target = $region90
        $region89: #{rgcn_forward.2} parent=69 // pred_region
          %v782 = vld [vmem:[%s345] sm:$0xff]
          %v783 = vld [vmem:[%s345 + $0x8] sm:$0xff]
          %v784 = vld [vmem:[%s345 + $0x10] sm:$0xff]
          %v785 = vld [vmem:[%s345 + $0x18] sm:$0xff]
          %v786 = vld [vmem:[%s345 + $0x20] sm:$0xff]
          %v787 = vld [vmem:[%s345 + $0x28] sm:$0xff]
          %v788 = vld [vmem:[%s345 + $0x30] sm:$0xff]
          %v789 = vld [vmem:[%s345 + $0x38] sm:$0xff]
          %v790 = vld [vmem:[%s345 + $0x40] sm:$0xff]
          %v791 = vld [vmem:[%s345 + $0x48] sm:$0xff]
          %v792 = vld [vmem:[%s345 + $0x50] sm:$0xff]
          %v793 = vld [vmem:[%s345 + $0x58] sm:$0xff]
          %v794 = vld [vmem:[%s345 + $0x60] sm:$0xff]
          %v795 = vld [vmem:[%s345 + $0x68] sm:$0xff]
          %v796 = vld [vmem:[%s345 + $0x70] sm:$0xff]
          %v797 = vld [vmem:[%s345 + $0x78] sm:$0xff]
          %v798 = vmax.f32 %v782, 0.0
          %v799 = vmax.f32 %v783, 0.0
          %v800 = vmax.f32 %v784, 0.0
          %v801 = vmax.f32 %v785, 0.0
          %v802 = vmax.f32 %v786, 0.0
          %v803 = vmax.f32 %v787, 0.0
          %v804 = vmax.f32 %v788, 0.0
          %v805 = vmax.f32 %v789, 0.0
          %v806 = vmax.f32 %v790, 0.0
          %v807 = vmax.f32 %v791, 0.0
          %v808 = vmax.f32 %v792, 0.0
          %v809 = vmax.f32 %v793, 0.0
          %v810 = vmax.f32 %v794, 0.0
          %v811 = vmax.f32 %v795, 0.0
          %v812 = vmax.f32 %v796, 0.0
          %v813 = vmax.f32 %v797, 0.0
          %814 = vst [vmem:[%s345] sm:$0xff] %v798
          %815 = vst [vmem:[%s345 + $0x8] sm:$0xff] %v799
          %816 = vst [vmem:[%s345 + $0x10] sm:$0xff] %v800
          %817 = vst [vmem:[%s345 + $0x18] sm:$0xff] %v801
          %818 = vst [vmem:[%s345 + $0x20] sm:$0xff] %v802
          %819 = vst [vmem:[%s345 + $0x28] sm:$0xff] %v803
          %820 = vst [vmem:[%s345 + $0x30] sm:$0xff] %v804
          %821 = vst [vmem:[%s345 + $0x38] sm:$0xff] %v805
          %822 = vst [vmem:[%s345 + $0x40] sm:$0xff] %v806
          %823 = vst [vmem:[%s345 + $0x48] sm:$0xff] %v807
          %824 = vst [vmem:[%s345 + $0x50] sm:$0xff] %v808
          %825 = vst [vmem:[%s345 + $0x58] sm:$0xff] %v809
          %826 = vst [vmem:[%s345 + $0x60] sm:$0xff] %v810
          %827 = vst [vmem:[%s345 + $0x68] sm:$0xff] %v811
          %828 = vst [vmem:[%s345 + $0x70] sm:$0xff] %v812
          %829 = vst [vmem:[%s345 + $0x78] sm:$0xff] %v813
        $region90: #{rgcn_forward.2} parent=69 // pred_fallthru
          _
        %s830 = smul.u32 16, %s20
        %p831 = scmp.lt.s32.totalorder %s830, 31
        %s832 = scalar_select %p831, %s830, 31
        %s833 = smul.addr %s832, 8
        %s834 = scalar_lea.vmem %s4, %s833
        // Predicated region
        $region91: #{rgcn_forward.2} parent=69 // pred_check
          %p835 = pneg %p159
        $region92: #{rgcn_forward.2} parent=69 // pred_check_branch
          %837 = sbr.rel (%p835) target = $region94
        $region93: #{rgcn_forward.2} parent=69 // pred_region
          %s838 = smul.u32 16, %s20
        $region94: #{rgcn_forward.2} parent=69 // pred_fallthru
          _
      $region70: #{rgcn_forward.2} parent=5 // pred_fallthru
        _
      %p839 = scmp.le.s32.totalorder 2, %s10
      // Predicated region
      $region95: #{rgcn_forward.2} parent=5 // pred_check
        %p840 = pneg %p839
      $region96: #{rgcn_forward.2} parent=5 // pred_check_branch
        %842 = sbr.rel (%p840) target = $region98
      $region97: #{rgcn_forward.2} parent=5 // pred_region
        %s843 = ssub.s32 %s10, 2
        // Predicated region
        $region99: #{rgcn_forward.2} parent=97 // pred_check
          %p844 = pneg %p165
        $region100: #{rgcn_forward.2} parent=97 // pred_check_branch
          %846 = sbr.rel (%p844) target = $region102
        $region101: #{rgcn_forward.2} parent=97 // pred_region
          %s847 = smul.u32 16, %s23
          %p848 = scmp.lt.s32.totalorder %s847, 31
          %s849 = scalar_select %p848, %s847, 31
          %s850 = smul.addr %s849, 8
          %s851 = scalar_lea.vmem %s4, %s850
        $region102: #{rgcn_forward.2} parent=97 // pred_fallthru
          _
      $region98: #{rgcn_forward.2} parent=5 // pred_fallthru
        _
    $region6: #{rgcn_forward.2} parent=1 // loop_footer
      %s14 = sadd.s32 1, %s10
    $region7: #{rgcn_forward.2} parent=1 // loop_footer_branch
      %9 = sbr.rel target = $region3
    $region8: #{rgcn_forward.2} parent=1 // loop_exit
      _

// kernel: rgcn_forward.3
$region0: #{rgcn_forward.3}
  #allocation0 [shape = 'u32[]', space=smem, size = 0x4, offset = 0x4, fixed_abs, tag = 'smem constant byte address 0x4 - core index']
  #allocation1 [shape = 'u32[72,128]{1,0:T(1,128)}', space=vmem, size = 0x9000, scoped, tag = 'internal scratch']
  #allocation2 [shape = 'f32[128,128]{1,0:T(8,128)}', space=vmem, size = 0x10000, scoped, tag = 'scratch operand']
  %s0 = inlined_call_operand.vmem [shape: s8[3,256,256], index: 0, kind: input, shape index: {}]
  %s1 = inlined_call_operand.vmem [shape: bf16[3,256,128], index: 1, kind: input, shape index: {}]
  %s2 = inlined_call_operand.vmem [shape: f32[3,256,1], index: 2, kind: input, shape index: {}]
  %s3 = inlined_call_operand.vmem [shape: f32[1,128], index: 3, kind: input, shape index: {}]
  %s4 = inlined_call_operand.vmem [shape: f32[256,128], index: 4, kind: output, shape index: {}]
  %s5 = sld [smem:[#allocation0]]
  $region99: #{rgcn_forward.3} parent=0
    _
  %s7 = ssub.s32 1, %s5
  %s8 = scalar_select 0, %s7, %s5
  $region1: #{rgcn_forward.3} parent=0
    #allocation3 [shape = 'u8[32768]{0}', space=vmem, size = 0x8000, scoped, tag = 'input window, operand 0']
    loop: start=0, step=1, limit=14
    $region2: #{rgcn_forward.3} parent=1 // loop_pre_header
      _
    $region3: #{rgcn_forward.3} parent=1 // loop_header
      %s10 = sphi 0, %s14
      %p11 = scmp.ge.s32.totalorder %s10, 14
      %s17 = sphi 0, %s36
      %s18 = sphi 0, %s32
      %s19 = sphi 0, %s28
      %s20 = sphi 0, %s17
      %s21 = sphi 0, %s18
      %s22 = sphi 0, %s19
      %s23 = sphi 0, %s20
      %s24 = sphi 0, %s21
      %s25 = sphi 0, %s22
      %s43 = sphi 0, %s45
      %s46 = sphi 0, %s43
      %s47 = sphi 0, %s46
      %s63 = sphi 0, %s47
      %s71 = sphi 0, %s73
      %s74 = sphi 0, %s71
      %s75 = sphi 0, %s74
      %s91 = sphi 0, %s75
      %s99 = sphi 0, %s101
      %s102 = sphi 0, %s99
      %s103 = sphi 0, %s102
      %s119 = sphi 0, %s103
      %s123 = sphi 0, %s123
      %s125 = sphi 0, %s123
      %s126 = sphi 0, %s125
      %s140 = sphi 0, %s126
      %s146 = sphi 0, %s148
      %s149 = sphi 0, %s146
      %s150 = sphi 0, %s149
      %s166 = sphi 0, %s150
    $region4: #{rgcn_forward.3} parent=1 // loop_header_branch
      %13 = sbr.rel (%p11) target = $region8
    $region5: #{rgcn_forward.3} parent=1 // loop_body
      %s15 = ssub.s32 %s10, 1
      %s16 = ssub.s32 %s10, 2
      %s26 = sadd.s32 1, %s19
      %p27 = scmp.ge.s32.totalorder %s26, 2
      %s28 = scalar_select %p27, 0, %s26
      %s29 = sadd.s32 1, %s18
      %s30 = scalar_select %p27, %s29, %s18
      %p31 = scmp.ge.s32.totalorder %s30, 3
      %s32 = scalar_select %p31, 0, %s30
      %s33 = sadd.s32 1, %s17
      %s34 = scalar_select %p31, %s33, %s17
      %p35 = scmp.ge.s32.totalorder %s34, 2
      %s36 = scalar_select %p35, 0, %s34
      %s37 = ssub.s32 %s18, %s32
      %s38 = ssub.s32 %s17, %s36
      %s39 = sor.u32 %s37, %s38
      %s40 = ssub.s32 %s19, %s28
      %s41 = sor.u32 %s39, %s40
      %p42 = scmp.eq.s32.totalorder %s41, 0
      %s44 = sadd.s32 %s43, 1
      %s45 = scalar_select %p42, %s43, %s44
      %p48 = pneg %p42
      %p49 = scmp.eq.s32.totalorder %s10, 11
      %p50 = por %p48, %p49
      %p51 = scmp.ne.s32.totalorder %s43, %s46
      %p52 = scmp.eq.s32.totalorder %s10, 0
      %p53 = por %p51, %p52
      %p54 = scmp.ne.s32.totalorder %s43, %s46
      %p55 = scmp.eq.s32.totalorder %s15, 11
      %p56 = por %p54, %p55
      %p57 = scmp.ne.s32.totalorder %s46, %s47
      %p58 = scmp.eq.s32.totalorder %s15, 0
      %p59 = por %p57, %p58
      %p60 = scmp.ne.s32.totalorder %s46, %s47
      %p61 = scmp.eq.s32.totalorder %s16, 11
      %p62 = por %p60, %p61
      %p64 = scmp.ne.s32.totalorder %s47, %s63
      %p65 = scmp.eq.s32.totalorder %s16, 0
      %p66 = por %p64, %p65
      %s67 = ssub.s32 %s18, %s32
      %s68 = ssub.s32 %s19, %s28
      %s69 = sor.u32 %s67, %s68
      %p70 = scmp.eq.s32.totalorder %s69, 0
      %s72 = sadd.s32 %s71, 1
      %s73 = scalar_select %p70, %s71, %s72
      %p76 = pneg %p70
      %p77 = scmp.eq.s32.totalorder %s10, 11
      %p78 = por %p76, %p77
      %p79 = scmp.ne.s32.totalorder %s71, %s74
      %p80 = scmp.eq.s32.totalorder %s10, 0
      %p81 = por %p79, %p80
      %p82 = scmp.ne.s32.totalorder %s71, %s74
      %p83 = scmp.eq.s32.totalorder %s15, 11
      %p84 = por %p82, %p83
      %p85 = scmp.ne.s32.totalorder %s74, %s75
      %p86 = scmp.eq.s32.totalorder %s15, 0
      %p87 = por %p85, %p86
      %p88 = scmp.ne.s32.totalorder %s74, %s75
      %p89 = scmp.eq.s32.totalorder %s16, 11
      %p90 = por %p88, %p89
      %p92 = scmp.ne.s32.totalorder %s75, %s91
      %p93 = scmp.eq.s32.totalorder %s16, 0
      %p94 = por %p92, %p93
      %s95 = ssub.s32 %s18, %s32
      %s96 = ssub.s32 %s17, %s36
      %s97 = sor.u32 %s95, %s96
      %p98 = scmp.eq.s32.totalorder %s97, 0
      %s100 = sadd.s32 %s99, 1
      %s101 = scalar_select %p98, %s99, %s100
      %p104 = pneg %p98
      %p105 = scmp.eq.s32.totalorder %s10, 11
      %p106 = por %p104, %p105
      %p107 = scmp.ne.s32.totalorder %s99, %s102
      %p108 = scmp.eq.s32.totalorder %s10, 0
      %p109 = por %p107, %p108
      %p110 = scmp.ne.s32.totalorder %s99, %s102
      %p111 = scmp.eq.s32.totalorder %s15, 11
      %p112 = por %p110, %p111
      %p113 = scmp.ne.s32.totalorder %s102, %s103
      %p114 = scmp.eq.s32.totalorder %s15, 0
      %p115 = por %p113, %p114
      %p116 = scmp.ne.s32.totalorder %s102, %s103
      %p117 = scmp.eq.s32.totalorder %s16, 11
      %p118 = por %p116, %p117
      %p120 = scmp.ne.s32.totalorder %s103, %s119
      %p121 = scmp.eq.s32.totalorder %s16, 0
      %p122 = por %p120, %p121
      %s124 = sadd.s32 %s123, 1
      %p127 = scmp.eq.s32.totalorder %s10, 11
      %p128 = scmp.ne.s32.totalorder %s123, %s125
      %p129 = scmp.eq.s32.totalorder %s10, 0
      %p130 = por %p128, %p129
      %p131 = scmp.ne.s32.totalorder %s123, %s125
      %p132 = scmp.eq.s32.totalorder %s15, 11
      %p133 = por %p131, %p132
      %p134 = scmp.ne.s32.totalorder %s125, %s126
      %p135 = scmp.eq.s32.totalorder %s15, 0
      %p136 = por %p134, %p135
      %p137 = scmp.ne.s32.totalorder %s125, %s126
      %p138 = scmp.eq.s32.totalorder %s16, 11
      %p139 = por %p137, %p138
      %p141 = scmp.ne.s32.totalorder %s126, %s140
      %p142 = scmp.eq.s32.totalorder %s16, 0
      %p143 = por %p141, %p142
      %s144 = ssub.s32 %s17, %s36
      %p145 = scmp.eq.s32.totalorder %s144, 0
      %s147 = sadd.s32 %s146, 1
      %s148 = scalar_select %p145, %s146, %s147
      %p151 = pneg %p145
      %p152 = scmp.eq.s32.totalorder %s10, 11
      %p153 = por %p151, %p152
      %p154 = scmp.ne.s32.totalorder %s146, %s149
      %p155 = scmp.eq.s32.totalorder %s10, 0
      %p156 = por %p154, %p155
      %p157 = scmp.ne.s32.totalorder %s146, %s149
      %p158 = scmp.eq.s32.totalorder %s15, 11
      %p159 = por %p157, %p158
      %p160 = scmp.ne.s32.totalorder %s149, %s150
      %p161 = scmp.eq.s32.totalorder %s15, 0
      %p162 = por %p160, %p161
      %p163 = scmp.ne.s32.totalorder %s149, %s150
      %p164 = scmp.eq.s32.totalorder %s16, 11
      %p165 = por %p163, %p164
      %p167 = scmp.ne.s32.totalorder %s150, %s166
      %p168 = scmp.eq.s32.totalorder %s16, 0
      %p169 = por %p167, %p168
      %p170 = scmp.le.s32.totalorder 1, %s10
      %p171 = scmp.lt.s32.totalorder %s10, 13
      %p172 = pnand %p170, %p171
      %p173 = pneg %p172
      // Predicated region
      $region9: #{rgcn_forward.3} parent=5 // pred_check
        _
      $region10: #{rgcn_forward.3} parent=5 // pred_check_branch
        %175 = sbr.rel (%p172) target = $region12
      $region11: #{rgcn_forward.3} parent=5 // pred_region
        %s176 = ssub.s32 %s10, 1
        // Predicated region
        $region13: #{rgcn_forward.3} parent=11 // pred_check
          %p177 = pneg %p136
        $region14: #{rgcn_forward.3} parent=11 // pred_check_branch
          %179 = sbr.rel (%p177) target = $region16
        $region15: #{rgcn_forward.3} parent=11 // pred_region
          _
        $region16: #{rgcn_forward.3} parent=11 // pred_fallthru
          _
      $region12: #{rgcn_forward.3} parent=5 // pred_fallthru
        _
      %p180 = scmp.lt.s32.totalorder %s10, 12
      // Predicated region
      $region17: #{rgcn_forward.3} parent=5 // pred_check
        %p181 = pneg %p180
      $region18: #{rgcn_forward.3} parent=5 // pred_check_branch
        %183 = sbr.rel (%p181) target = $region20
      $region19: #{rgcn_forward.3} parent=5 // pred_region
        // Predicated region
        $region21: #{rgcn_forward.3} parent=19 // pred_check
          %p184 = pneg %p53
        $region22: #{rgcn_forward.3} parent=19 // pred_check_branch
          %186 = sbr.rel (%p184) target = $region24
        $region23: #{rgcn_forward.3} parent=19 // pred_region
          %s187 = sand.u32 %s43, 1
          %s188 = sand.u32 %s43, 1
          %s189 = smul.addr %s188, 32
          %s190 = scalar_lea.vmem [#allocation3], %s189
          %s191 = smul.u32 4, %s17
          %s192 = smul.addr %s191, 2
          %s193 = sadd.s32 %s19, %s192
          %s194 = smul.addr %s18, 16
          %s195 = sadd.s32 %s193, %s194
          %s196 = smul.addr %s195, 8
          %s197 = scalar_lea.vmem %s0, %s196
          // Predicated region
          $region25: #{rgcn_forward.3} parent=23 // pred_check
            _
          $region26: #{rgcn_forward.3} parent=23 // pred_check_branch
            %199 = sbr.rel (0) target = $region28
          $region27: #{rgcn_forward.3} parent=23 // pred_region
            // Predicated region
            $region29: #{rgcn_forward.3} parent=27 // pred_check
              _
            $region30: #{rgcn_forward.3} parent=27 // pred_check_branch
              %201 = sbr.rel (0) target = $region32
            $region31: #{rgcn_forward.3} parent=27 // pred_region
              // Predicated region
              $region44: #{rgcn_forward.3} parent=31 // pred_check
                _
              $region45: #{rgcn_forward.3} parent=31 // pred_check_branch
                %223 = sbr.rel (0) target = $region47
              $region46: #{rgcn_forward.3} parent=31 // pred_region
                loop: start=0, step=1, limit=1
                $region48: #{rgcn_forward.3} parent=46 // loop_pre_header
                  _
                $region49: #{rgcn_forward.3} parent=46 // loop_header
                  %s225 = sphi 0, %s229
                  %p226 = scmp.ge.s32.totalorder %s225, 1
                  %s230 = sphi %s197, %s197
                  %s231 = sphi %s190, %s190
                $region50: #{rgcn_forward.3} parent=46 // loop_header_branch
                  %228 = sbr.rel (%p226) target = $region54
                $region51: #{rgcn_forward.3} parent=46 // loop_body
                  %v232 = vld [vmem:[%s230] sm:$0xff]
                  %233 = vst [vmem:[%s231] sm:$0xff] %v232
                  %v234 = vld [vmem:[%s230 + $0x10] sm:$0xff]
                  %235 = vst [vmem:[%s231 + $0x8] sm:$0xff] %v234
                  %v236 = vld [vmem:[%s230 + $0x20] sm:$0xff]
                  %237 = vst [vmem:[%s231 + $0x10] sm:$0xff] %v236
                  %v238 = vld [vmem:[%s230 + $0x30] sm:$0xff]
                  %239 = vst [vmem:[%s231 + $0x18] sm:$0xff] %v238
                $region52: #{rgcn_forward.3} parent=46 // loop_footer
                  %s229 = sadd.s32 1, %s225
                $region53: #{rgcn_forward.3} parent=46 // loop_footer_branch
                  %224 = sbr.rel target = $region49
                $region54: #{rgcn_forward.3} parent=46 // loop_exit
                  _
              $region47: #{rgcn_forward.3} parent=31 // pred_fallthru
                _
              // Predicated region
              $region55: #{rgcn_forward.3} parent=31 // pred_check
                _
              $region56: #{rgcn_forward.3} parent=31 // pred_check_branch
                %241 = sbr.rel target = $region58
              $region57: #{rgcn_forward.3} parent=31 // pred_region
                _
              $region58: #{rgcn_forward.3} parent=31 // pred_fallthru
                _
            $region32: #{rgcn_forward.3} parent=27 // pred_fallthru
              _
            // Predicated region
            $region33: #{rgcn_forward.3} parent=27 // pred_check
              _
            $region34: #{rgcn_forward.3} parent=27 // pred_check_branch
              %203 = sbr.rel target = $region36
            $region35: #{rgcn_forward.3} parent=27 // pred_region
              %s205 = ssub.s32 256, 1
              loop: start=0, step=1, limit=1
              $region37: #{rgcn_forward.3} parent=35 // loop_pre_header
                _
              $region38: #{rgcn_forward.3} parent=35 // loop_header
                %s207 = sphi 0, %s211
                %p208 = scmp.ge.s32.totalorder %s207, 1
                %s212 = sphi %s197, %s197
                %s213 = sphi %s190, %s190
              $region39: #{rgcn_forward.3} parent=35 // loop_header_branch
                %210 = sbr.rel (%p208) target = $region43
              $region40: #{rgcn_forward.3} parent=35 // loop_body
                %v214 = vld [vmem:[%s212] sm:%s205]
                %215 = vst [vmem:[%s213] sm:%s205] %v214
                %v216 = vld [vmem:[%s212 + $0x10] sm:%s205]
                %217 = vst [vmem:[%s213 + $0x8] sm:%s205] %v216
                %v218 = vld [vmem:[%s212 + $0x20] sm:%s205]
                %219 = vst [vmem:[%s213 + $0x10] sm:%s205] %v218
                %v220 = vld [vmem:[%s212 + $0x30] sm:%s205]
                %221 = vst [vmem:[%s213 + $0x18] sm:%s205] %v220
              $region41: #{rgcn_forward.3} parent=35 // loop_footer
                %s211 = sadd.s32 1, %s207
              $region42: #{rgcn_forward.3} parent=35 // loop_footer_branch
                %206 = sbr.rel target = $region38
              $region43: #{rgcn_forward.3} parent=35 // loop_exit
                _
            $region36: #{rgcn_forward.3} parent=27 // pred_fallthru
              _
          $region28: #{rgcn_forward.3} parent=23 // pred_fallthru
            _
          %242 = vnop
        $region24: #{rgcn_forward.3} parent=19 // pred_fallthru
          _
        // Predicated region
        $region59: #{rgcn_forward.3} parent=19 // pred_check
          %p243 = pneg %p81
        $region60: #{rgcn_forward.3} parent=19 // pred_check_branch
          %245 = sbr.rel (%p243) target = $region62
        $region61: #{rgcn_forward.3} parent=19 // pred_region
          %s246 = smul.u32 16, %s19
          %p247 = scmp.lt.s32.totalorder %s18, 2
          %s248 = scalar_select %p247, %s18, 2
          %p249 = scmp.lt.s32.totalorder %s246, 31
          %s250 = scalar_select %p249, %s246, 31
          %s251 = smul.addr %s248, 32
          %s252 = sadd.s32 %s250, %s251
          %s253 = smul.addr %s252, 4
          %s254 = scalar_lea.vmem %s1, %s253
          %s255 = smul.u32 16, %s19
        $region62: #{rgcn_forward.3} parent=19 // pred_fallthru
          _
        // Predicated region
        $region63: #{rgcn_forward.3} parent=19 // pred_check
          %p256 = pneg %p109
        $region64: #{rgcn_forward.3} parent=19 // pred_check_branch
          %258 = sbr.rel (%p256) target = $region66
        $region65: #{rgcn_forward.3} parent=19 // pred_region
          %s259 = smul.u32 16, %s17
          %p260 = scmp.lt.s32.totalorder %s18, 2
          %s261 = scalar_select %p260, %s18, 2
          %p262 = scmp.lt.s32.totalorder %s259, 31
          %s263 = scalar_select %p262, %s259, 31
          %s264 = smul.addr %s261, 32
          %s265 = sadd.s32 %s263, %s264
          %s266 = smul.addr %s265, 8
          %s267 = scalar_lea.vmem %s2, %s266
          %s268 = smul.u32 16, %s17
        $region66: #{rgcn_forward.3} parent=19 // pred_fallthru
          _
      $region20: #{rgcn_forward.3} parent=5 // pred_fallthru
        _
      %p269 = scmp.le.s32.totalorder 1, %s10
      %p270 = scmp.lt.s32.totalorder %s10, 13
      %p271 = pnand %p269, %p270
      %p272 = pneg %p271
      // Predicated region
      $region67: #{rgcn_forward.3} parent=5 // pred_check
        _
      $region68: #{rgcn_forward.3} parent=5 // pred_check_branch
        %274 = sbr.rel (%p271) target = $region70
      $region69: #{rgcn_forward.3} parent=5 // pred_region
        %s275 = ssub.s32 %s10, 1
        %s276 = sand.u32 %s46, 1
        %s277 = sand.u32 %s46, 1
        %s278 = smul.addr %s277, 32
        %s279 = scalar_lea.vmem [#allocation3], %s278
        // Predicated region
        $region71: #{rgcn_forward.3} parent=69 // pred_check
          %p280 = pneg %p59
        $region72: #{rgcn_forward.3} parent=69 // pred_check_branch
          %282 = sbr.rel (%p280) target = $region74
        $region73: #{rgcn_forward.3} parent=69 // pred_region
          _
        $region74: #{rgcn_forward.3} parent=69 // pred_fallthru
          _
        %s283 = sand.u32 %s46, 1
        %s284 = sand.u32 %s46, 1
        %s285 = smul.addr %s284, 32
        %s286 = scalar_lea.vmem [#allocation3], %s285
        %p287 = pneg %p59
        %p288 = pneg %p56
        %s289 = smul.u32 16, %s22
        %p290 = scmp.lt.s32.totalorder %s21, 2
        %s291 = scalar_select %p290, %s21, 2
        %p292 = scmp.lt.s32.totalorder %s289, 31
        %s293 = scalar_select %p292, %s289, 31
        %s294 = smul.addr %s291, 32
        %s295 = sadd.s32 %s293, %s294
        %s296 = smul.addr %s295, 4
        %s297 = scalar_lea.vmem %s1, %s296
        %p298 = pneg %p87
        %p299 = pneg %p84
        %s300 = smul.u32 16, %s20
        %p301 = scmp.lt.s32.totalorder %s21, 2
        %s302 = scalar_select %p301, %s21, 2
        %p303 = scmp.lt.s32.totalorder %s300, 31
        %s304 = scalar_select %p303, %s300, 31
        %s305 = smul.addr %s302, 32
        %s306 = sadd.s32 %s304, %s305
        %s307 = smul.addr %s306, 8
        %s308 = scalar_lea.vmem %s2, %s307
        %p309 = pneg %p115
        %p310 = pneg %p112
        %p311 = pneg %p136
        %p312 = pneg %p133
        %p313 = pneg %p162
        %p314 = pneg %p159
        %s315 = smul.u32 16, %s20
        %p316 = scmp.lt.s32.totalorder %s315, 31
        %s317 = scalar_select %p316, %s315, 31
        %s318 = smul.addr %s317, 8
        %s319 = scalar_lea.vmem %s4, %s318
        %s320 = smul.u32 4, %s20
        %s321 = smul.u32 16, %s22
        %p322 = scmp.lt.s32.totalorder %s21, 2
        %s323 = scalar_select %p322, %s21, 2
        %p324 = scmp.lt.s32.totalorder %s321, 31
        %s325 = scalar_select %p324, %s321, 31
        %s326 = smul.addr %s323, 32
        %s327 = sadd.s32 %s325, %s326
        %s328 = smul.addr %s327, 4
        %s329 = scalar_lea.vmem %s1, %s328
        %s330 = smul.u32 16, %s22
        %s331 = smul.u32 16, %s20
        %p332 = scmp.lt.s32.totalorder %s21, 2
        %s333 = scalar_select %p332, %s21, 2
        %p334 = scmp.lt.s32.totalorder %s331, 31
        %s335 = scalar_select %p334, %s331, 31
        %s336 = smul.addr %s333, 32
        %s337 = sadd.s32 %s335, %s336
        %s338 = smul.addr %s337, 8
        %s339 = scalar_lea.vmem %s2, %s338
        %s340 = smul.u32 16, %s20
        %s341 = smul.u32 16, %s20
        %p342 = scmp.lt.s32.totalorder %s341, 31
        %s343 = scalar_select %p342, %s341, 31
        %s344 = smul.addr %s343, 8
        %s345 = scalar_lea.vmem %s4, %s344
        %s346 = smul.u32 16, %s20
        %p347 = scmp.eq.s32.totalorder %s21, 0
        %p348 = scmp.eq.s32.totalorder %s22, 0
        %p349 = pnand %p347, %p348
        %p350 = pneg %p349
        // Predicated region
        $region75: #{rgcn_forward.3} parent=69 // pred_check
          _
        $region76: #{rgcn_forward.3} parent=69 // pred_check_branch
          %352 = sbr.rel (%p349) target = $region78
        $region77: #{rgcn_forward.3} parent=69 // pred_region
          %v353 = vld [vmem:[%s3] sm:$0x1]
          %v355 = vperm.slane %v353, 0
          %357 = vst [vmem:[%s345] sm:$0xff] %v355
          %358 = vst [vmem:[%s345 + $0x8] sm:$0xff] %v355
          %359 = vst [vmem:[%s345 + $0x10] sm:$0xff] %v355
          %360 = vst [vmem:[%s345 + $0x18] sm:$0xff] %v355
          %361 = vst [vmem:[%s345 + $0x20] sm:$0xff] %v355
          %362 = vst [vmem:[%s345 + $0x28] sm:$0xff] %v355
          %363 = vst [vmem:[%s345 + $0x30] sm:$0xff] %v355
          %364 = vst [vmem:[%s345 + $0x38] sm:$0xff] %v355
          %365 = vst [vmem:[%s345 + $0x40] sm:$0xff] %v355
          %366 = vst [vmem:[%s345 + $0x48] sm:$0xff] %v355
          %367 = vst [vmem:[%s345 + $0x50] sm:$0xff] %v355
          %368 = vst [vmem:[%s345 + $0x58] sm:$0xff] %v355
          %369 = vst [vmem:[%s345 + $0x60] sm:$0xff] %v355
          %370 = vst [vmem:[%s345 + $0x68] sm:$0xff] %v355
          %371 = vst [vmem:[%s345 + $0x70] sm:$0xff] %v355
          %372 = vst [vmem:[%s345 + $0x78] sm:$0xff] %v355
        $region78: #{rgcn_forward.3} parent=69 // pred_fallthru
          _
        // Predicated region
        $region79: #{rgcn_forward.3} parent=69 // pred_check
          %p373 = pneg %p348
        $region80: #{rgcn_forward.3} parent=69 // pred_check_branch
          %375 = sbr.rel (%p373) target = $region82
        $region81: #{rgcn_forward.3} parent=69 // pred_region
          %376 = vst [vmem:[#allocation2] sm:$0xff] 0.0
          %377 = vst [vmem:[#allocation2 + $0x8] sm:$0xff] 0.0
          %378 = vst [vmem:[#allocation2 + $0x10] sm:$0xff] 0.0
          %379 = vst [vmem:[#allocation2 + $0x18] sm:$0xff] 0.0
          %380 = vst [vmem:[#allocation2 + $0x20] sm:$0xff] 0.0
          %381 = vst [vmem:[#allocation2 + $0x28] sm:$0xff] 0.0
          %382 = vst [vmem:[#allocation2 + $0x30] sm:$0xff] 0.0
          %383 = vst [vmem:[#allocation2 + $0x38] sm:$0xff] 0.0
          %384 = vst [vmem:[#allocation2 + $0x40] sm:$0xff] 0.0
          %385 = vst [vmem:[#allocation2 + $0x48] sm:$0xff] 0.0
          %386 = vst [vmem:[#allocation2 + $0x50] sm:$0xff] 0.0
          %387 = vst [vmem:[#allocation2 + $0x58] sm:$0xff] 0.0
          %388 = vst [vmem:[#allocation2 + $0x60] sm:$0xff] 0.0
          %389 = vst [vmem:[#allocation2 + $0x68] sm:$0xff] 0.0
          %390 = vst [vmem:[#allocation2 + $0x70] sm:$0xff] 0.0
          %391 = vst [vmem:[#allocation2 + $0x78] sm:$0xff] 0.0
        $region82: #{rgcn_forward.3} parent=69 // pred_fallthru
          _
        %v392 = vld [vmem:[%s279] sm:$0xff]
        %v393 = vld [vmem:[%s279 + $0x8] sm:$0xff]
        %v394 = vld [vmem:[%s279 + $0x10] sm:$0xff]
        %v395 = vld [vmem:[%s279 + $0x18] sm:$0xff]
        %v396 = vunpack.c.0.s8 %v392
        %v397 = vunpack.c.1.s8 %v392
        %v398 = vunpack.c.2.s8 %v392
        %v399 = vunpack.c.3.s8 %v392
        %v400 = vunpack.c.0.s8 %v393
        %v401 = vunpack.c.1.s8 %v393
        %v402 = vunpack.c.2.s8 %v393
        %v403 = vunpack.c.3.s8 %v393
        %v404 = vunpack.c.0.s8 %v394
        %v405 = vunpack.c.1.s8 %v394
        %v406 = vunpack.c.2.s8 %v394
        %v407 = vunpack.c.3.s8 %v394
        %v408 = vunpack.c.0.s8 %v395
        %v409 = vunpack.c.1.s8 %v395
        %v410 = vunpack.c.2.s8 %v395
        %v411 = vunpack.c.3.s8 %v395
        %v412 = vcvt.s32.f32 %v396
        %v413 = vcvt.s32.f32 %v397
        %v414 = vcvt.s32.f32 %v398
        %v415 = vcvt.s32.f32 %v399
        %v416 = vcvt.s32.f32 %v400
        %v417 = vcvt.s32.f32 %v401
        %v418 = vcvt.s32.f32 %v402
        %v419 = vcvt.s32.f32 %v403
        %v420 = vcvt.s32.f32 %v404
        %v421 = vcvt.s32.f32 %v405
        %v422 = vcvt.s32.f32 %v406
        %v423 = vcvt.s32.f32 %v407
        %v424 = vcvt.s32.f32 %v408
        %v425 = vcvt.s32.f32 %v409
        %v426 = vcvt.s32.f32 %v410
        %v427 = vcvt.s32.f32 %v411
        %v428 = vpack.c.bf16 %v413, %v412
        %v429 = vpack.c.bf16 %v415, %v414
        %v430 = vpack.c.bf16 %v417, %v416
        %v431 = vpack.c.bf16 %v419, %v418
        %v432 = vpack.c.bf16 %v421, %v420
        %v433 = vpack.c.bf16 %v423, %v422
        %v434 = vpack.c.bf16 %v425, %v424
        %v435 = vpack.c.bf16 %v427, %v426
        %v436 = vld [vmem:[#allocation2] sm:$0xff]
        %v437 = vld [vmem:[#allocation2 + $0x8] sm:$0xff]
        %v438 = vld [vmem:[#allocation2 + $0x10] sm:$0xff]
        %v439 = vld [vmem:[#allocation2 + $0x18] sm:$0xff]
        %v440 = vld [vmem:[#allocation2 + $0x20] sm:$0xff]
        %v441 = vld [vmem:[#allocation2 + $0x28] sm:$0xff]
        %v442 = vld [vmem:[#allocation2 + $0x30] sm:$0xff]
        %v443 = vld [vmem:[#allocation2 + $0x38] sm:$0xff]
        %v444 = vld [vmem:[#allocation2 + $0x40] sm:$0xff]
        %v445 = vld [vmem:[#allocation2 + $0x48] sm:$0xff]
        %v446 = vld [vmem:[#allocation2 + $0x50] sm:$0xff]
        %v447 = vld [vmem:[#allocation2 + $0x58] sm:$0xff]
        %v448 = vld [vmem:[#allocation2 + $0x60] sm:$0xff]
        %v449 = vld [vmem:[#allocation2 + $0x68] sm:$0xff]
        %v450 = vld [vmem:[#allocation2 + $0x70] sm:$0xff]
        %v451 = vld [vmem:[#allocation2 + $0x78] sm:$0xff]
        %v452 = vld [vmem:[%s329] sm:$0xf]
        %v453 = vld [vmem:[%s329 + $0x4] sm:$0xf]
        %v454 = vld [vmem:[%s329 + $0x8] sm:$0xf]
        %v455 = vld [vmem:[%s329 + $0xc] sm:$0xf]
        %v456 = vld [vmem:[%s329 + $0x10] sm:$0xf]
        %v457 = vld [vmem:[%s329 + $0x14] sm:$0xf]
        %v458 = vld [vmem:[%s329 + $0x18] sm:$0xf]
        %v459 = vld [vmem:[%s329 + $0x1c] sm:$0xf]
        %v460 = vld [vmem:[%s329 + $0x20] sm:$0xf]
        %v461 = vld [vmem:[%s329 + $0x24] sm:$0xf]
        %v462 = vld [vmem:[%s329 + $0x28] sm:$0xf]
        %v463 = vld [vmem:[%s329 + $0x2c] sm:$0xf]
        %v464 = vld [vmem:[%s329 + $0x30] sm:$0xf]
        %v465 = vld [vmem:[%s329 + $0x34] sm:$0xf]
        %v466 = vld [vmem:[%s329 + $0x38] sm:$0xf]
        %v467 = vld [vmem:[%s329 + $0x3c] sm:$0xf]
        %v484 = vunpack.c.l.b16 %v452
        %v485 = vunpack.c.l.b16 %v453
        %v486 = vunpack.c.l.b16 %v454
        %v487 = vunpack.c.l.b16 %v455
        %v488 = vunpack.c.l.b16 %v456
        %v489 = vunpack.c.l.b16 %v457
        %v490 = vunpack.c.l.b16 %v458
        %v491 = vunpack.c.l.b16 %v459
        %v492 = vunpack.c.l.b16 %v460
        %v493 = vunpack.c.l.b16 %v461
        %v494 = vunpack.c.l.b16 %v462
        %v495 = vunpack.c.l.b16 %v463
        %v496 = vunpack.c.l.b16 %v464
        %v497 = vunpack.c.l.b16 %v465
        %v498 = vunpack.c.l.b16 %v466
        %v499 = vunpack.c.l.b16 %v467
        %v500 = vpack.c.b16 %v485, %v484
        %v501 = vpack.c.b16 %v487, %v486
        %v502 = vpack.c.b16 %v489, %v488
        %v503 = vpack.c.b16 %v491, %v490
        %v504 = vpack.c.b16 %v493, %v492
        %v505 = vpack.c.b16 %v495, %v494
        %v506 = vpack.c.b16 %v497, %v496
        %v507 = vpack.c.b16 %v499, %v498
        %516 = vmatpush.bf16.msra.mxu0 %v507
        %517 = vmatpush.bf16.msra.mxu0 %v506
        %518 = vmatpush.bf16.msra.mxu0 %v505
        %519 = vmatpush.bf16.msra.mxu0 %v504
        %520 = vmatpush.bf16.msra.mxu0 %v503
        %521 = vmatpush.bf16.msra.mxu0 %v502
        %522 = vmatpush.bf16.msra.mxu0 %v501
        %523 = vmatpush.bf16.msra.mxu0 %v500
        %524 = vmatmul.bf16.gmra.mxu0 %v428
        %v525 = vpop.f32.mrf.mxu0
        %v526 = vadd.f32 0.0, %v525
        %v527 = vpop.f32.mrf.mxu0
        %v528 = vadd.f32 0.0, %v527
        %529 = vmatmul.bf16.gmra.mxu0 %v429
        %v530 = vpop.f32.mrf.mxu0
        %v531 = vadd.f32 0.0, %v530
        %v532 = vpop.f32.mrf.mxu0
        %v533 = vadd.f32 0.0, %v532
        %534 = vmatmul.bf16.gmra.mxu0 %v430
        %v535 = vpop.f32.mrf.mxu0
        %v536 = vadd.f32 0.0, %v535
        %v537 = vpop.f32.mrf.mxu0
        %v538 = vadd.f32 0.0, %v537
        %539 = vmatmul.bf16.gmra.mxu0 %v431
        %v540 = vpop.f32.mrf.mxu0
        %v541 = vadd.f32 0.0, %v540
        %v542 = vpop.f32.mrf.mxu0
        %v543 = vadd.f32 0.0, %v542
        %544 = vmatmul.bf16.gmra.mxu0 %v432
        %v545 = vpop.f32.mrf.mxu0
        %v546 = vadd.f32 0.0, %v545
        %v547 = vpop.f32.mrf.mxu0
        %v548 = vadd.f32 0.0, %v547
        %549 = vmatmul.bf16.gmra.mxu0 %v433
        %v550 = vpop.f32.mrf.mxu0
        %v551 = vadd.f32 0.0, %v550
        %v552 = vpop.f32.mrf.mxu0
        %v553 = vadd.f32 0.0, %v552
        %554 = vmatmul.bf16.gmra.mxu0 %v434
        %v555 = vpop.f32.mrf.mxu0
        %v556 = vadd.f32 0.0, %v555
        %v557 = vpop.f32.mrf.mxu0
        %v558 = vadd.f32 0.0, %v557
        %559 = vmatmul.bf16.gmra.mxu0 %v435
        %v560 = vpop.f32.mrf.mxu0
        %v561 = vadd.f32 0.0, %v560
        %v562 = vpop.f32.mrf.mxu0
        %v563 = vadd.f32 0.0, %v562
        %564 = vdwg.mxu0
        %v565 = vadd.f32 %v436, %v526
        %v566 = vadd.f32 %v437, %v528
        %v567 = vadd.f32 %v438, %v531
        %v568 = vadd.f32 %v439, %v533
        %v569 = vadd.f32 %v440, %v536
        %v570 = vadd.f32 %v441, %v538
        %v571 = vadd.f32 %v442, %v541
        %v572 = vadd.f32 %v443, %v543
        %v573 = vadd.f32 %v444, %v546
        %v574 = vadd.f32 %v445, %v548
        %v575 = vadd.f32 %v446, %v551
        %v576 = vadd.f32 %v447, %v553
        %v577 = vadd.f32 %v448, %v556
        %v578 = vadd.f32 %v449, %v558
        %v579 = vadd.f32 %v450, %v561
        %v580 = vadd.f32 %v451, %v563
        %581 = vst [vmem:[#allocation2] sm:$0xff] %v565
        %582 = vst [vmem:[#allocation2 + $0x8] sm:$0xff] %v566
        %583 = vst [vmem:[#allocation2 + $0x10] sm:$0xff] %v567
        %584 = vst [vmem:[#allocation2 + $0x18] sm:$0xff] %v568
        %585 = vst [vmem:[#allocation2 + $0x20] sm:$0xff] %v569
        %586 = vst [vmem:[#allocation2 + $0x28] sm:$0xff] %v570
        %587 = vst [vmem:[#allocation2 + $0x30] sm:$0xff] %v571
        %588 = vst [vmem:[#allocation2 + $0x38] sm:$0xff] %v572
        %589 = vst [vmem:[#allocation2 + $0x40] sm:$0xff] %v573
        %590 = vst [vmem:[#allocation2 + $0x48] sm:$0xff] %v574
        %591 = vst [vmem:[#allocation2 + $0x50] sm:$0xff] %v575
        %592 = vst [vmem:[#allocation2 + $0x58] sm:$0xff] %v576
        %593 = vst [vmem:[#allocation2 + $0x60] sm:$0xff] %v577
        %594 = vst [vmem:[#allocation2 + $0x68] sm:$0xff] %v578
        %595 = vst [vmem:[#allocation2 + $0x70] sm:$0xff] %v579
        %596 = vst [vmem:[#allocation2 + $0x78] sm:$0xff] %v580
        %p597 = scmp.eq.s32.totalorder %s22, 1
        // Predicated region
        $region83: #{rgcn_forward.3} parent=69 // pred_check
          %p598 = pneg %p597
        $region84: #{rgcn_forward.3} parent=69 // pred_check_branch
          %600 = sbr.rel (%p598) target = $region86
        $region85: #{rgcn_forward.3} parent=69 // pred_region
          %v601 = vld [vmem:[%s345] sm:$0xff]
          %v602 = vld [vmem:[%s345 + $0x8] sm:$0xff]
          %v603 = vld [vmem:[%s345 + $0x10] sm:$0xff]
          %v604 = vld [vmem:[%s345 + $0x18] sm:$0xff]
          %v605 = vld [vmem:[%s345 + $0x20] sm:$0xff]
          %v606 = vld [vmem:[%s345 + $0x28] sm:$0xff]
          %v607 = vld [vmem:[%s345 + $0x30] sm:$0xff]
          %v608 = vld [vmem:[%s345 + $0x38] sm:$0xff]
          %v609 = vld [vmem:[%s345 + $0x40] sm:$0xff]
          %v610 = vld [vmem:[%s345 + $0x48] sm:$0xff]
          %v611 = vld [vmem:[%s345 + $0x50] sm:$0xff]
          %v612 = vld [vmem:[%s345 + $0x58] sm:$0xff]
          %v613 = vld [vmem:[%s345 + $0x60] sm:$0xff]
          %v614 = vld [vmem:[%s345 + $0x68] sm:$0xff]
          %v615 = vld [vmem:[%s345 + $0x70] sm:$0xff]
          %v616 = vld [vmem:[%s345 + $0x78] sm:$0xff]
          %v617 = vld [vmem:[%s339] sm:$0xff]
          %v618 = vld [vmem:[%s339 + $0x8] sm:$0xff]
          %v619 = vld [vmem:[%s339 + $0x10] sm:$0xff]
          %v620 = vld [vmem:[%s339 + $0x18] sm:$0xff]
          %v621 = vld [vmem:[%s339 + $0x20] sm:$0xff]
          %v622 = vld [vmem:[%s339 + $0x28] sm:$0xff]
          %v623 = vld [vmem:[%s339 + $0x30] sm:$0xff]
          %v624 = vld [vmem:[%s339 + $0x38] sm:$0xff]
          %v625 = vld [vmem:[%s339 + $0x40] sm:$0xff]
          %v626 = vld [vmem:[%s339 + $0x48] sm:$0xff]
          %v627 = vld [vmem:[%s339 + $0x50] sm:$0xff]
          %v628 = vld [vmem:[%s339 + $0x58] sm:$0xff]
          %v629 = vld [vmem:[%s339 + $0x60] sm:$0xff]
          %v630 = vld [vmem:[%s339 + $0x68] sm:$0xff]
          %v631 = vld [vmem:[%s339 + $0x70] sm:$0xff]
          %v632 = vld [vmem:[%s339 + $0x78] sm:$0xff]
          %v633 = vld [vmem:[#allocation2] sm:$0xff]
          %v634 = vld [vmem:[#allocation2 + $0x8] sm:$0xff]
          %v635 = vld [vmem:[#allocation2 + $0x10] sm:$0xff]
          %v636 = vld [vmem:[#allocation2 + $0x18] sm:$0xff]
          %v637 = vld [vmem:[#allocation2 + $0x20] sm:$0xff]
          %v638 = vld [vmem:[#allocation2 + $0x28] sm:$0xff]
          %v639 = vld [vmem:[#allocation2 + $0x30] sm:$0xff]
          %v640 = vld [vmem:[#allocation2 + $0x38] sm:$0xff]
          %v641 = vld [vmem:[#allocation2 + $0x40] sm:$0xff]
          %v642 = vld [vmem:[#allocation2 + $0x48] sm:$0xff]
          %v643 = vld [vmem:[#allocation2 + $0x50] sm:$0xff]
          %v644 = vld [vmem:[#allocation2 + $0x58] sm:$0xff]
          %v645 = vld [vmem:[#allocation2 + $0x60] sm:$0xff]
          %v646 = vld [vmem:[#allocation2 + $0x68] sm:$0xff]
          %v647 = vld [vmem:[#allocation2 + $0x70] sm:$0xff]
          %v648 = vld [vmem:[#allocation2 + $0x78] sm:$0xff]
          %650 = vset.pattern.permute.xlu0 0
          %651 = vperm.xlu0 %650, %v617
          %v652 = vpop.permute.xlu0 %651
          %655 = vset.pattern.permute.xlu0 0
          %656 = vperm.xlu0 %655, %v618
          %v657 = vpop.permute.xlu0 %656
          %660 = vset.pattern.permute.xlu0 0
          %661 = vperm.xlu0 %660, %v619
          %v662 = vpop.permute.xlu0 %661
          %665 = vset.pattern.permute.xlu0 0
          %666 = vperm.xlu0 %665, %v620
          %v667 = vpop.permute.xlu0 %666
          %670 = vset.pattern.permute.xlu0 0
          %671 = vperm.xlu0 %670, %v621
          %v672 = vpop.permute.xlu0 %671
          %675 = vset.pattern.permute.xlu0 0
          %676 = vperm.xlu0 %675, %v622
          %v677 = vpop.permute.xlu0 %676
          %680 = vset.pattern.permute.xlu0 0
          %681 = vperm.xlu0 %680, %v623
          %v682 = vpop.permute.xlu0 %681
          %685 = vset.pattern.permute.xlu0 0
          %686 = vperm.xlu0 %685, %v624
          %v687 = vpop.permute.xlu0 %686
          %690 = vset.pattern.permute.xlu0 0
          %691 = vperm.xlu0 %690, %v625
          %v692 = vpop.permute.xlu0 %691
          %695 = vset.pattern.permute.xlu0 0
          %696 = vperm.xlu0 %695, %v626
          %v697 = vpop.permute.xlu0 %696
          %700 = vset.pattern.permute.xlu0 0
          %701 = vperm.xlu0 %700, %v627
          %v702 = vpop.permute.xlu0 %701
          %705 = vset.pattern.permute.xlu0 0
          %706 = vperm.xlu0 %705, %v628
          %v707 = vpop.permute.xlu0 %706
          %710 = vset.pattern.permute.xlu0 0
          %711 = vperm.xlu0 %710, %v629
          %v712 = vpop.permute.xlu0 %711
          %715 = vset.pattern.permute.xlu0 0
          %716 = vperm.xlu0 %715, %v630
          %v717 = vpop.permute.xlu0 %716
          %720 = vset.pattern.permute.xlu0 0
          %721 = vperm.xlu0 %720, %v631
          %v722 = vpop.permute.xlu0 %721
          %725 = vset.pattern.permute.xlu0 0
          %726 = vperm.xlu0 %725, %v632
          %v727 = vpop.permute.xlu0 %726
          %v729 = vmul.f32 %v652, %v633
          %v730 = vmul.f32 %v657, %v634
          %v731 = vmul.f32 %v662, %v635
          %v732 = vmul.f32 %v667, %v636
          %v733 = vmul.f32 %v672, %v637
          %v734 = vmul.f32 %v677, %v638
          %v735 = vmul.f32 %v682, %v639
          %v736 = vmul.f32 %v687, %v640
          %v737 = vmul.f32 %v692, %v641
          %v738 = vmul.f32 %v697, %v642
          %v739 = vmul.f32 %v702, %v643
          %v740 = vmul.f32 %v707, %v644
          %v741 = vmul.f32 %v712, %v645
          %v742 = vmul.f32 %v717, %v646
          %v743 = vmul.f32 %v722, %v647
          %v744 = vmul.f32 %v727, %v648
          %v745 = vadd.f32 %v601, %v729
          %v746 = vadd.f32 %v602, %v730
          %v747 = vadd.f32 %v603, %v731
          %v748 = vadd.f32 %v604, %v732
          %v749 = vadd.f32 %v605, %v733
          %v750 = vadd.f32 %v606, %v734
          %v751 = vadd.f32 %v607, %v735
          %v752 = vadd.f32 %v608, %v736
          %v753 = vadd.f32 %v609, %v737
          %v754 = vadd.f32 %v610, %v738
          %v755 = vadd.f32 %v611, %v739
          %v756 = vadd.f32 %v612, %v740
          %v757 = vadd.f32 %v613, %v741
          %v758 = vadd.f32 %v614, %v742
          %v759 = vadd.f32 %v615, %v743
          %v760 = vadd.f32 %v616, %v744
          %761 = vst [vmem:[%s345] sm:$0xff] %v745
          %762 = vst [vmem:[%s345 + $0x8] sm:$0xff] %v746
          %763 = vst [vmem:[%s345 + $0x10] sm:$0xff] %v747
          %764 = vst [vmem:[%s345 + $0x18] sm:$0xff] %v748
          %765 = vst [vmem:[%s345 + $0x20] sm:$0xff] %v749
          %766 = vst [vmem:[%s345 + $0x28] sm:$0xff] %v750
          %767 = vst [vmem:[%s345 + $0x30] sm:$0xff] %v751
          %768 = vst [vmem:[%s345 + $0x38] sm:$0xff] %v752
          %769 = vst [vmem:[%s345 + $0x40] sm:$0xff] %v753
          %770 = vst [vmem:[%s345 + $0x48] sm:$0xff] %v754
          %771 = vst [vmem:[%s345 + $0x50] sm:$0xff] %v755
          %772 = vst [vmem:[%s345 + $0x58] sm:$0xff] %v756
          %773 = vst [vmem:[%s345 + $0x60] sm:$0xff] %v757
          %774 = vst [vmem:[%s345 + $0x68] sm:$0xff] %v758
          %775 = vst [vmem:[%s345 + $0x70] sm:$0xff] %v759
          %776 = vst [vmem:[%s345 + $0x78] sm:$0xff] %v760
        $region86: #{rgcn_forward.3} parent=69 // pred_fallthru
          _
        %s777 = smul.u32 16, %s20
        %p778 = scmp.lt.s32.totalorder %s777, 31
        %s779 = scalar_select %p778, %s777, 31
        %s780 = smul.addr %s779, 8
        %s781 = scalar_lea.vmem %s4, %s780
        // Predicated region
        $region87: #{rgcn_forward.3} parent=69 // pred_check
          %p782 = pneg %p159
        $region88: #{rgcn_forward.3} parent=69 // pred_check_branch
          %784 = sbr.rel (%p782) target = $region90
        $region89: #{rgcn_forward.3} parent=69 // pred_region
          %s785 = smul.u32 16, %s20
        $region90: #{rgcn_forward.3} parent=69 // pred_fallthru
          _
      $region70: #{rgcn_forward.3} parent=5 // pred_fallthru
        _
      %p786 = scmp.le.s32.totalorder 2, %s10
      // Predicated region
      $region91: #{rgcn_forward.3} parent=5 // pred_check
        %p787 = pneg %p786
      $region92: #{rgcn_forward.3} parent=5 // pred_check_branch
        %789 = sbr.rel (%p787) target = $region94
      $region93: #{rgcn_forward.3} parent=5 // pred_region
        %s790 = ssub.s32 %s10, 2
        // Predicated region
        $region95: #{rgcn_forward.3} parent=93 // pred_check
          %p791 = pneg %p165
        $region96: #{rgcn_forward.3} parent=93 // pred_check_branch
          %793 = sbr.rel (%p791) target = $region98
        $region97: #{rgcn_forward.3} parent=93 // pred_region
          %s794 = smul.u32 16, %s23
          %p795 = scmp.lt.s32.totalorder %s794, 31
          %s796 = scalar_select %p795, %s794, 31
          %s797 = smul.addr %s796, 8
          %s798 = scalar_lea.vmem %s4, %s797
        $region98: #{rgcn_forward.3} parent=93 // pred_fallthru
          _
      $region94: #{rgcn_forward.3} parent=5 // pred_fallthru
        _
    $region6: #{rgcn_forward.3} parent=1 // loop_footer
      %s14 = sadd.s32 1, %s10
    $region7: #{rgcn_forward.3} parent=1 // loop_footer_branch
      %9 = sbr.rel target = $region3
    $region8: #{rgcn_forward.3} parent=1 // loop_exit
      _

</llo_original>
